<compile_context>
chip_gen: v7x
topology: tpu7x:2x2x1
jax: 0.10.0
libtpu: 0.0.40
codegen_flags: <defaults>
</compile_context>

<pallas_src>
import functools

import jax
import jax.numpy as jnp
from jax.experimental import pallas as pl

BN_EPS = 1e-5


# ----------------------------- in-kernel helpers ----------------------------

def _mxu(w, x):
    """bf16 MXU matmul with f32 accumulation: (C,K)@(K,M)->(C,M)."""
    return jnp.dot(w.astype(jnp.bfloat16), x.astype(jnp.bfloat16),
                   preferred_element_type=jnp.float32)


def _bn_cols(z, gamma, beta, relu):
    """BatchNorm over columns (per-channel rows), training-mode batch stats."""
    m = z.shape[1]
    mean = jnp.sum(z, axis=1, keepdims=True) * (1.0 / m)
    zc = z - mean
    var = jnp.sum(zc * zc, axis=1, keepdims=True) * (1.0 / m)   # biased var
    y = zc * jax.lax.rsqrt(var + BN_EPS) * gamma + beta
    return jnp.maximum(y, 0.0) if relu else y


# ------------------------------ Pallas kernels ------------------------------

def _conv_bn_kernel(a_ref, w_ref, g_ref, b_ref, o_ref, *, relu_out):
    # conv (as GEMM) + BatchNorm (+ ReLU), all fused.
    z = _mxu(w_ref[...], a_ref[...])                     # (C, M)
    o_ref[...] = _bn_cols(z, g_ref[...], b_ref[...], relu_out)


def _residual_kernel(a_ref, w1_ref, g1_ref, b1_ref, w2_ref, g2_ref, b2_ref,
                     h_ref, o_ref):
    # x + BN(conv1x1(ReLU(BN(conv3x3(ReLU(x)))))) -- fully fused.
    a = jnp.maximum(a_ref[...], 0.0)                     # ReLU(im2col(x))
    t = _bn_cols(_mxu(w1_ref[...], a), g1_ref[...], b1_ref[...], True)
    v = _bn_cols(_mxu(w2_ref[...], t), g2_ref[...], b2_ref[...], False)
    o_ref[...] = h_ref[...] + v


def _residual_final_kernel(a_ref, w1_ref, g1_ref, b1_ref, w2_ref, g2_ref,
                           b2_ref, h_ref, w4_ref, b4_ref, o_ref):
    # residual block 2 + final 1x1 conv (with bias), fused.
    a = jnp.maximum(a_ref[...], 0.0)
    t = _bn_cols(_mxu(w1_ref[...], a), g1_ref[...], b1_ref[...], True)
    v = _bn_cols(_mxu(w2_ref[...], t), g2_ref[...], b2_ref[...], False)
    hn = h_ref[...] + v
    o_ref[...] = _mxu(w4_ref[...], hn) + b4_ref[...]


# ------------------------------ call wrappers -------------------------------

def _full(shape):
    return pl.BlockSpec(shape, lambda i: tuple(0 for _ in shape))


def conv_bn_pallas(a_T, w, gamma, beta, relu_out):
    K, M = a_T.shape
    C = w.shape[0]
    return pl.pallas_call(
        functools.partial(_conv_bn_kernel, relu_out=relu_out),
        out_shape=jax.ShapeDtypeStruct((C, M), jnp.float32),
        grid=(1,),
        in_specs=[_full((K, M)), _full((C, K)), _full((C, 1)), _full((C, 1))],
        out_specs=_full((C, M)),
    )(a_T, w, gamma.reshape(C, 1), beta.reshape(C, 1))


def residual_pallas(a_T, h_T, q):
    K, M = a_T.shape
    C = h_T.shape[0]
    return pl.pallas_call(
        _residual_kernel,
        out_shape=jax.ShapeDtypeStruct((C, M), jnp.float32),
        grid=(1,),
        in_specs=[_full((K, M)), _full((C, K)), _full((C, 1)), _full((C, 1)),
                  _full((C, C)), _full((C, 1)), _full((C, 1)), _full((C, M))],
        out_specs=_full((C, M)),
    )(a_T, q['cw1'].reshape(C, K), q['g1'].reshape(C, 1), q['b1'].reshape(C, 1),
      q['cw2'].reshape(C, C), q['g2'].reshape(C, 1), q['b2'].reshape(C, 1), h_T)


def residual_final_pallas(a_T, h_T, q, w4, b4):
    K, M = a_T.shape
    C = h_T.shape[0]
    C4 = w4.shape[0]
    return pl.pallas_call(
        _residual_final_kernel,
        out_shape=jax.ShapeDtypeStruct((C4, M), jnp.float32),
        grid=(1,),
        in_specs=[_full((K, M)), _full((C, K)), _full((C, 1)), _full((C, 1)),
                  _full((C, C)), _full((C, 1)), _full((C, 1)), _full((C, M)),
                  _full((C4, C)), _full((C4, 1))],
        out_specs=_full((C4, M)),
    )(a_T, q['cw1'].reshape(C, K), q['g1'].reshape(C, 1), q['b1'].reshape(C, 1),
      q['cw2'].reshape(C, C), q['g2'].reshape(C, 1), q['b2'].reshape(C, 1), h_T,
      w4, b4.reshape(C4, 1))


# --------------------------- XLA-side layout glue ----------------------------

def im2col_T(x_nhwc, kh, kw, stride, pad):
    """Transposed im2col: returns (Cin*kh*kw, N*Ho*Wo) with PyTorch weight order."""
    N, H, W, Cin = x_nhwc.shape
    Ho = (H + 2 * pad - kh) // stride + 1
    Wo = (W + 2 * pad - kw) // stride + 1
    xp = jnp.pad(x_nhwc, ((0, 0), (pad, pad), (pad, pad), (0, 0)))
    taps = []
    for dy in range(kh):
        for dx in range(kw):
            taps.append(xp[:, dy:dy + stride * Ho:stride,
                            dx:dx + stride * Wo:stride, :])
    p = jnp.stack(taps, axis=0)                 # (kh*kw, N, Ho, Wo, Cin)
    p = jnp.transpose(p, (4, 0, 1, 2, 3))       # (Cin, kh*kw, N, Ho, Wo)
    return p.reshape(Cin * kh * kw, N * Ho * Wo), (N, Ho, Wo)


def cm_to_nhwc(h_cm, N, H, W):
    C = h_cm.shape[0]
    return jnp.transpose(h_cm.reshape(C, N, H, W), (1, 2, 3, 0))


# ------------------------------ Encoder forward -----------------------------

def encoder_forward_pallas(x_nchw, P):
    x = jnp.transpose(x_nchw, (0, 2, 3, 1))                 # NCHW -> NHWC
    N = x.shape[0]
    C = P['g1'].shape[0]

    # Conv(1,C,4,2,1) -> BN -> ReLU                         (kernel 1)
    a, (_, H, W) = im2col_T(x, 4, 4, 2, 1)
    h = conv_bn_pallas(a, P['w1'].reshape(C, -1), P['g1'], P['b1'], True)

    # Conv(C,C,4,2,1) -> BN                                 (kernel 2)
    a, (_, H, W) = im2col_T(cm_to_nhwc(h, N, H, W), 4, 4, 2, 1)
    h = conv_bn_pallas(a, P['w2'].reshape(C, -1), P['g2'], P['b2'], False)

    # Conv(C,C,3,2,1) -> BN                                 (kernel 3)
    a, (_, H, W) = im2col_T(cm_to_nhwc(h, N, H, W), 3, 3, 2, 1)
    h = conv_bn_pallas(a, P['w3'].reshape(C, -1), P['g3'], P['b3'], False)

    # Residual block 1 (fully fused)                        (kernel 4)
    a, _ = im2col_T(cm_to_nhwc(h, N, H, W), 3, 3, 1, 1)
    h = residual_pallas(a, h, P['res1'])

    # Residual block 2 + final Conv(C, L*E, 1) with bias    (kernel 5)
    a, _ = im2col_T(cm_to_nhwc(h, N, H, W), 3, 3, 1, 1)
    C4 = P['w4'].shape[0]
    out = residual_final_pallas(a, h, P['res2'], P['w4'].reshape(C4, C), P['b4'])

    return jnp.transpose(out.reshape(C4, N, H, W), (1, 0, 2, 3))   # -> NCHW


# ----------------------- pure-JAX reference (sanity) ------------------------

def conv2d_ref(x_nhwc, w_oihw, bias, stride, pad, relu_in=False):
    x = jnp.maximum(x_nhwc, 0.0) if relu_in else x_nhwc
    out = jax.lax.conv_general_dilated(
        x, jnp.transpose(w_oihw, (2, 3, 1, 0)),
        window_strides=(stride, stride),
        padding=((pad, pad), (pad, pad)),
        dimension_numbers=('NHWC', 'HWIO', 'NHWC'))
    if bias is not None:
        out = out + bias
    return out


def batchnorm_ref(x, gamma, beta, relu=False):
    mean = jnp.mean(x, axis=(0, 1, 2), keepdims=True)
    var = jnp.mean((x - mean) ** 2, axis=(0, 1, 2), keepdims=True)
    y = (x - mean) * jax.lax.rsqrt(var + BN_EPS) * gamma + beta
    return jnp.maximum(y, 0.0) if relu else y


def encoder_forward_ref(x_nchw, P):
    x = jnp.transpose(x_nchw, (0, 2, 3, 1))
    h = batchnorm_ref(conv2d_ref(x, P['w1'], None, 2, 1), P['g1'], P['b1'], relu=True)
    h = batchnorm_ref(conv2d_ref(h, P['w2'], None, 2, 1), P['g2'], P['b2'])
    h = batchnorm_ref(conv2d_ref(h, P['w3'], None, 2, 1), P['g3'], P['b3'])
    for rk in ('res1', 'res2'):
        q = P[rk]
        u = batchnorm_ref(conv2d_ref(h, q['cw1'], None, 1, 1, relu_in=True),
                          q['g1'], q['b1'], relu=True)
        h = h + batchnorm_ref(conv2d_ref(u, q['cw2'], None, 1, 0), q['g2'], q['b2'])
    out = conv2d_ref(h, P['w4'], P['b4'], 1, 0)
    return jnp.transpose(out, (0, 3, 1, 2))


# --------------------------------- params -----------------------------------

def init_params(key, channels, latent_dim, embedding_dim):
    C = channels
    ks = jax.random.split(key, 12)

    def w(k, shape, scale=0.1):
        return scale * jax.random.normal(k, shape, jnp.float32)

    def g(k, c):
        return 1.0 + 0.1 * jax.random.normal(k, (c,), jnp.float32)

    def b(k, c):
        return 0.1 * jax.random.normal(k, (c,), jnp.float32)

    P = {
        'w1': w(ks[0], (C, 1, 4, 4)), 'g1': g(ks[1], C), 'b1': b(ks[2], C),
        'w2': w(ks[3], (C, C, 4, 4)), 'g2': g(ks[4], C), 'b2': b(ks[5], C),
        'w3': w(ks[6], (C, C, 3, 3)), 'g3': g(ks[7], C), 'b3': b(ks[8], C),
        'w4': w(ks[9], (latent_dim * embedding_dim, C, 1, 1)),
        'b4': b(ks[10], latent_dim * embedding_dim),
    }
    rkeys = jax.random.split(ks[11], 12)
    for idx, name in enumerate(('res1', 'res2')):
        rk = rkeys[idx * 6:(idx + 1) * 6]
        P[name] = {
            'cw1': w(rk[0], (C, C, 3, 3)), 'g1': g(rk[1], C), 'b1': b(rk[2], C),
            'cw2': w(rk[3], (C, C, 1, 1)), 'g2': g(rk[4], C), 'b2': b(rk[5], C),
        }
    return P


if __name__ == "__main__":
    key = jax.random.PRNGKey(0)
    pkey, xkey = jax.random.split(key)

    channels, latent_dim, embedding_dim = 8, 4, 8
    P = init_params(pkey, channels, latent_dim, embedding_dim)

    # NCHW input, single-channel image (module's first conv has in_channels=1).
    x = jax.random.normal(xkey, (2, 1, 32, 32), jnp.float32)

    pallas_fn = jax.jit(functools.partial(encoder_forward_pallas, P=P))
    out = jax.block_until_ready(pallas_fn(x))
    assert out.shape == (2, latent_dim * embedding_dim, 4, 4), out.shape

    # Sanity check vs pure-XLA reference (tol reflects bf16 MXU passes).
    ref_fn = jax.jit(functools.partial(encoder_forward_ref, P=P))
    ref = jax.block_until_ready(ref_fn(x))
    max_err = float(jnp.max(jnp.abs(out - ref)))
    assert max_err < 5e-2, f"mismatch vs reference: {max_err}"

    print("KERNEL_OK")
</pallas_src>

<mosaic_0001>
module attributes {stable_mosaic.version = 11 : i64} {
  func.func @_conv_bn_kernel(%arg0: i32, %arg1: memref<16x512xf32, #tpu.memory_space<vmem>>, %arg2: memref<8x16xf32, #tpu.memory_space<vmem>>, %arg3: memref<8x1xf32, #tpu.memory_space<vmem>>, %arg4: memref<8x1xf32, #tpu.memory_space<vmem>>, %arg5: memref<8x512xf32, #tpu.memory_space<vmem>>) attributes {dimension_semantics = [#tpu.dimension_semantics<arbitrary>], iteration_bounds = array<i64: 1>, scalar_prefetch = 0 : i64, scratch_operands = 0 : i64, tpu.core_type = #tpu.core_type<tc>, window_params = [{pipeline_mode = #tpu.pipeline_mode<synchronous>, transform_indices = @transform_0, window_bounds = array<i64: 16, 512>}, {pipeline_mode = #tpu.pipeline_mode<synchronous>, transform_indices = @transform_1, window_bounds = array<i64: 8, 16>}, {pipeline_mode = #tpu.pipeline_mode<synchronous>, transform_indices = @transform_2, window_bounds = array<i64: 8, 1>}, {pipeline_mode = #tpu.pipeline_mode<synchronous>, transform_indices = @transform_3, window_bounds = array<i64: 8, 1>}, {pipeline_mode = #tpu.pipeline_mode<synchronous>, transform_indices = @transform_4, window_bounds = array<i64: 8, 512>}]} {
    %c0 = arith.constant 0 : index
    %c0_0 = arith.constant 0 : index
    %0 = vector.load %arg2[%c0, %c0_0] : memref<8x16xf32, #tpu.memory_space<vmem>>, vector<8x16xf32>
    %c0_1 = arith.constant 0 : index
    %c0_2 = arith.constant 0 : index
    %1 = vector.load %arg1[%c0_1, %c0_2] : memref<16x512xf32, #tpu.memory_space<vmem>>, vector<16x512xf32>
    %2 = arith.truncf %0 : vector<8x16xf32> to vector<8x16xbf16>
    %3 = arith.truncf %1 : vector<16x512xf32> to vector<16x512xbf16>
    %cst = arith.constant dense<0.000000e+00> : vector<8x512xf32>
    %4 = tpu.matmul %2, %3, %cst {dimension_numbers = #tpu.dot_dimension_numbers<[1], [0], [0], [1], [0, 0, 1, 1], [], []>} : vector<8x16xbf16>, vector<16x512xbf16>, vector<8x512xf32> -> vector<8x512xf32>
    %c0_3 = arith.constant 0 : index
    %c0_4 = arith.constant 0 : index
    %5 = vector.load %arg3[%c0_3, %c0_4] : memref<8x1xf32, #tpu.memory_space<vmem>>, vector<8x1xf32>
    %c0_5 = arith.constant 0 : index
    %c0_6 = arith.constant 0 : index
    %6 = vector.load %arg4[%c0_5, %c0_6] : memref<8x1xf32, #tpu.memory_space<vmem>>, vector<8x1xf32>
    %cst_7 = arith.constant dense<0.000000e+00> : vector<8xf32>
    %7 = vector.multi_reduction <add>, %4, %cst_7 [1] : vector<8x512xf32> to vector<8xf32>
    %8 = vector.shape_cast %7 : vector<8xf32> to vector<8x1xf32>
    %cst_8 = arith.constant 0.001953125 : f32
    %9 = vector.broadcast %cst_8 : f32 to vector<8x1xf32>
    %10 = arith.mulf %8, %9 : vector<8x1xf32>
    %11 = vector.broadcast %10 : vector<8x1xf32> to vector<8x512xf32>
    %12 = arith.subf %4, %11 : vector<8x512xf32>
    %13 = arith.mulf %12, %12 : vector<8x512xf32>
    %cst_9 = arith.constant dense<0.000000e+00> : vector<8xf32>
    %14 = vector.multi_reduction <add>, %13, %cst_9 [1] : vector<8x512xf32> to vector<8xf32>
    %15 = vector.shape_cast %14 : vector<8xf32> to vector<8x1xf32>
    %cst_10 = arith.constant 0.001953125 : f32
    %16 = vector.broadcast %cst_10 : f32 to vector<8x1xf32>
    %17 = arith.mulf %15, %16 : vector<8x1xf32>
    %cst_11 = arith.constant 9.99999974E-6 : f32
    %18 = vector.broadcast %cst_11 : f32 to vector<8x1xf32>
    %19 = arith.addf %17, %18 : vector<8x1xf32>
    %20 = math.rsqrt %19 : vector<8x1xf32>
    %21 = vector.broadcast %20 : vector<8x1xf32> to vector<8x512xf32>
    %22 = arith.mulf %12, %21 : vector<8x512xf32>
    %23 = vector.broadcast %5 : vector<8x1xf32> to vector<8x512xf32>
    %24 = arith.mulf %22, %23 : vector<8x512xf32>
    %25 = vector.broadcast %6 : vector<8x1xf32> to vector<8x512xf32>
    %26 = arith.addf %24, %25 : vector<8x512xf32>
    %cst_12 = arith.constant 0.000000e+00 : f32
    %27 = vector.broadcast %cst_12 : f32 to vector<8x512xf32>
    %28 = arith.maximumf %26, %27 : vector<8x512xf32>
    %c0_13 = arith.constant 0 : index
    %c0_14 = arith.constant 0 : index
    %29 = vector.load %arg5[%c0_13, %c0_14] : memref<8x512xf32, #tpu.memory_space<vmem>>, vector<8x512xf32>
    tpu.vector_store %arg5[%c0_13, %c0_14], %28 {strides = array<i32>} : memref<8x512xf32, #tpu.memory_space<vmem>>, vector<8x512xf32>,
    return
  }
  func.func @transform_0(%arg0: i32) -> (i32, i32) {
    %c0_i32 = arith.constant 0 : i32
    %c0_i32_0 = arith.constant 0 : i32
    %c0_i32_1 = arith.constant 0 : i32
    return %c0_i32, %c0_i32_0 : i32, i32
  }
  func.func @transform_1(%arg0: i32) -> (i32, i32) {
    %c0_i32 = arith.constant 0 : i32
    %c0_i32_0 = arith.constant 0 : i32
    %c0_i32_1 = arith.constant 0 : i32
    return %c0_i32, %c0_i32_0 : i32, i32
  }
  func.func @transform_2(%arg0: i32) -> (i32, i32) {
    %c0_i32 = arith.constant 0 : i32
    %c0_i32_0 = arith.constant 0 : i32
    %c0_i32_1 = arith.constant 0 : i32
    return %c0_i32, %c0_i32_0 : i32, i32
  }
  func.func @transform_3(%arg0: i32) -> (i32, i32) {
    %c0_i32 = arith.constant 0 : i32
    %c0_i32_0 = arith.constant 0 : i32
    %c0_i32_1 = arith.constant 0 : i32
    return %c0_i32, %c0_i32_0 : i32, i32
  }
  func.func @transform_4(%arg0: i32) -> (i32, i32) {
    %c0_i32 = arith.constant 0 : i32
    %c0_i32_0 = arith.constant 0 : i32
    %c0_i32_1 = arith.constant 0 : i32
    return %c0_i32, %c0_i32_0 : i32, i32
  }
}

module attributes {stable_mosaic.version = 11 : i64} {
  func.func @_conv_bn_kernel(%arg0: i32, %arg1: memref<128x128xf32, #tpu.memory_space<vmem>>, %arg2: memref<8x128xf32, #tpu.memory_space<vmem>>, %arg3: memref<8x1xf32, #tpu.memory_space<vmem>>, %arg4: memref<8x1xf32, #tpu.memory_space<vmem>>, %arg5: memref<8x128xf32, #tpu.memory_space<vmem>>) attributes {dimension_semantics = [#tpu.dimension_semantics<arbitrary>], iteration_bounds = array<i64: 1>, scalar_prefetch = 0 : i64, scratch_operands = 0 : i64, tpu.core_type = #tpu.core_type<tc>, window_params = [{pipeline_mode = #tpu.pipeline_mode<synchronous>, transform_indices = @transform_0, window_bounds = array<i64: 128, 128>}, {pipeline_mode = #tpu.pipeline_mode<synchronous>, transform_indices = @transform_1, window_bounds = array<i64: 8, 128>}, {pipeline_mode = #tpu.pipeline_mode<synchronous>, transform_indices = @transform_2, window_bounds = array<i64: 8, 1>}, {pipeline_mode = #tpu.pipeline_mode<synchronous>, transform_indices = @transform_3, window_bounds = array<i64: 8, 1>}, {pipeline_mode = #tpu.pipeline_mode<synchronous>, transform_indices = @transform_4, window_bounds = array<i64: 8, 128>}]} {
    %c0 = arith.constant 0 : index
    %c0_0 = arith.constant 0 : index
    %0 = vector.load %arg2[%c0, %c0_0] : memref<8x128xf32, #tpu.memory_space<vmem>>, vector<8x128xf32>
    %c0_1 = arith.constant 0 : index
    %c0_2 = arith.constant 0 : index
    %1 = vector.load %arg1[%c0_1, %c0_2] : memref<128x128xf32, #tpu.memory_space<vmem>>, vector<128x128xf32>
    %2 = arith.truncf %0 : vector<8x128xf32> to vector<8x128xbf16>
    %3 = arith.truncf %1 : vector<128x128xf32> to vector<128x128xbf16>
    %cst = arith.constant dense<0.000000e+00> : vector<8x128xf32>
    %4 = tpu.matmul %2, %3, %cst {dimension_numbers = #tpu.dot_dimension_numbers<[1], [0], [0], [1], [0, 0, 1, 1], [], []>} : vector<8x128xbf16>, vector<128x128xbf16>, vector<8x128xf32> -> vector<8x128xf32>
    %c0_3 = arith.constant 0 : index
    %c0_4 = arith.constant 0 : index
    %5 = vector.load %arg3[%c0_3, %c0_4] : memref<8x1xf32, #tpu.memory_space<vmem>>, vector<8x1xf32>
    %c0_5 = arith.constant 0 : index
    %c0_6 = arith.constant 0 : index
    %6 = vector.load %arg4[%c0_5, %c0_6] : memref<8x1xf32, #tpu.memory_space<vmem>>, vector<8x1xf32>
    %cst_7 = arith.constant dense<0.000000e+00> : vector<8xf32>
    %7 = vector.multi_reduction <add>, %4, %cst_7 [1] : vector<8x128xf32> to vector<8xf32>
    %8 = vector.shape_cast %7 : vector<8xf32> to vector<8x1xf32>
    %cst_8 = arith.constant 7.812500e-03 : f32
    %9 = vector.broadcast %cst_8 : f32 to vector<8x1xf32>
    %10 = arith.mulf %8, %9 : vector<8x1xf32>
    %11 = vector.broadcast %10 : vector<8x1xf32> to vector<8x128xf32>
    %12 = arith.subf %4, %11 : vector<8x128xf32>
    %13 = arith.mulf %12, %12 : vector<8x128xf32>
    %cst_9 = arith.constant dense<0.000000e+00> : vector<8xf32>
    %14 = vector.multi_reduction <add>, %13, %cst_9 [1] : vector<8x128xf32> to vector<8xf32>
    %15 = vector.shape_cast %14 : vector<8xf32> to vector<8x1xf32>
    %cst_10 = arith.constant 7.812500e-03 : f32
    %16 = vector.broadcast %cst_10 : f32 to vector<8x1xf32>
    %17 = arith.mulf %15, %16 : vector<8x1xf32>
    %cst_11 = arith.constant 9.99999974E-6 : f32
    %18 = vector.broadcast %cst_11 : f32 to vector<8x1xf32>
    %19 = arith.addf %17, %18 : vector<8x1xf32>
    %20 = math.rsqrt %19 : vector<8x1xf32>
    %21 = vector.broadcast %20 : vector<8x1xf32> to vector<8x128xf32>
    %22 = arith.mulf %12, %21 : vector<8x128xf32>
    %23 = vector.broadcast %5 : vector<8x1xf32> to vector<8x128xf32>
    %24 = arith.mulf %22, %23 : vector<8x128xf32>
    %25 = vector.broadcast %6 : vector<8x1xf32> to vector<8x128xf32>
    %26 = arith.addf %24, %25 : vector<8x128xf32>
    %c0_12 = arith.constant 0 : index
    %c0_13 = arith.constant 0 : index
    %27 = vector.load %arg5[%c0_12, %c0_13] : memref<8x128xf32, #tpu.memory_space<vmem>>, vector<8x128xf32>
    tpu.vector_store %arg5[%c0_12, %c0_13], %26 {strides = array<i32>} : memref<8x128xf32, #tpu.memory_space<vmem>>, vector<8x128xf32>,
    return
  }
  func.func @transform_0(%arg0: i32) -> (i32, i32) {
    %c0_i32 = arith.constant 0 : i32
    %c0_i32_0 = arith.constant 0 : i32
    %c0_i32_1 = arith.constant 0 : i32
    return %c0_i32, %c0_i32_0 : i32, i32
  }
  func.func @transform_1(%arg0: i32) -> (i32, i32) {
    %c0_i32 = arith.constant 0 : i32
    %c0_i32_0 = arith.constant 0 : i32
    %c0_i32_1 = arith.constant 0 : i32
    return %c0_i32, %c0_i32_0 : i32, i32
  }
  func.func @transform_2(%arg0: i32) -> (i32, i32) {
    %c0_i32 = arith.constant 0 : i32
    %c0_i32_0 = arith.constant 0 : i32
    %c0_i32_1 = arith.constant 0 : i32
    return %c0_i32, %c0_i32_0 : i32, i32
  }
  func.func @transform_3(%arg0: i32) -> (i32, i32) {
    %c0_i32 = arith.constant 0 : i32
    %c0_i32_0 = arith.constant 0 : i32
    %c0_i32_1 = arith.constant 0 : i32
    return %c0_i32, %c0_i32_0 : i32, i32
  }
  func.func @transform_4(%arg0: i32) -> (i32, i32) {
    %c0_i32 = arith.constant 0 : i32
    %c0_i32_0 = arith.constant 0 : i32
    %c0_i32_1 = arith.constant 0 : i32
    return %c0_i32, %c0_i32_0 : i32, i32
  }
}

module attributes {stable_mosaic.version = 11 : i64} {
  func.func @_conv_bn_kernel(%arg0: i32, %arg1: memref<72x32xf32, #tpu.memory_space<vmem>>, %arg2: memref<8x72xf32, #tpu.memory_space<vmem>>, %arg3: memref<8x1xf32, #tpu.memory_space<vmem>>, %arg4: memref<8x1xf32, #tpu.memory_space<vmem>>, %arg5: memref<8x32xf32, #tpu.memory_space<vmem>>) attributes {dimension_semantics = [#tpu.dimension_semantics<arbitrary>], iteration_bounds = array<i64: 1>, scalar_prefetch = 0 : i64, scratch_operands = 0 : i64, tpu.core_type = #tpu.core_type<tc>, window_params = [{pipeline_mode = #tpu.pipeline_mode<synchronous>, transform_indices = @transform_0, window_bounds = array<i64: 72, 32>}, {pipeline_mode = #tpu.pipeline_mode<synchronous>, transform_indices = @transform_1, window_bounds = array<i64: 8, 72>}, {pipeline_mode = #tpu.pipeline_mode<synchronous>, transform_indices = @transform_2, window_bounds = array<i64: 8, 1>}, {pipeline_mode = #tpu.pipeline_mode<synchronous>, transform_indices = @transform_3, window_bounds = array<i64: 8, 1>}, {pipeline_mode = #tpu.pipeline_mode<synchronous>, transform_indices = @transform_4, window_bounds = array<i64: 8, 32>}]} {
    %c0 = arith.constant 0 : index
    %c0_0 = arith.constant 0 : index
    %0 = vector.load %arg2[%c0, %c0_0] : memref<8x72xf32, #tpu.memory_space<vmem>>, vector<8x72xf32>
    %c0_1 = arith.constant 0 : index
    %c0_2 = arith.constant 0 : index
    %1 = vector.load %arg1[%c0_1, %c0_2] : memref<72x32xf32, #tpu.memory_space<vmem>>, vector<72x32xf32>
    %2 = arith.truncf %0 : vector<8x72xf32> to vector<8x72xbf16>
    %3 = arith.truncf %1 : vector<72x32xf32> to vector<72x32xbf16>
    %cst = arith.constant dense<0.000000e+00> : vector<8x32xf32>
    %4 = tpu.matmul %2, %3, %cst {dimension_numbers = #tpu.dot_dimension_numbers<[1], [0], [0], [1], [0, 0, 1, 1], [], []>} : vector<8x72xbf16>, vector<72x32xbf16>, vector<8x32xf32> -> vector<8x32xf32>
    %c0_3 = arith.constant 0 : index
    %c0_4 = arith.constant 0 : index
    %5 = vector.load %arg3[%c0_3, %c0_4] : memref<8x1xf32, #tpu.memory_space<vmem>>, vector<8x1xf32>
    %c0_5 = arith.constant 0 : index
    %c0_6 = arith.constant 0 : index
    %6 = vector.load %arg4[%c0_5, %c0_6] : memref<8x1xf32, #tpu.memory_space<vmem>>, vector<8x1xf32>
    %cst_7 = arith.constant dense<0.000000e+00> : vector<8xf32>
    %7 = vector.multi_reduction <add>, %4, %cst_7 [1] : vector<8x32xf32> to vector<8xf32>
    %8 = vector.shape_cast %7 : vector<8xf32> to vector<8x1xf32>
    %cst_8 = arith.constant 3.125000e-02 : f32
    %9 = vector.broadcast %cst_8 : f32 to vector<8x1xf32>
    %10 = arith.mulf %8, %9 : vector<8x1xf32>
    %11 = vector.broadcast %10 : vector<8x1xf32> to vector<8x32xf32>
    %12 = arith.subf %4, %11 : vector<8x32xf32>
    %13 = arith.mulf %12, %12 : vector<8x32xf32>
    %cst_9 = arith.constant dense<0.000000e+00> : vector<8xf32>
    %14 = vector.multi_reduction <add>, %13, %cst_9 [1] : vector<8x32xf32> to vector<8xf32>
    %15 = vector.shape_cast %14 : vector<8xf32> to vector<8x1xf32>
    %cst_10 = arith.constant 3.125000e-02 : f32
    %16 = vector.broadcast %cst_10 : f32 to vector<8x1xf32>
    %17 = arith.mulf %15, %16 : vector<8x1xf32>
    %cst_11 = arith.constant 9.99999974E-6 : f32
    %18 = vector.broadcast %cst_11 : f32 to vector<8x1xf32>
    %19 = arith.addf %17, %18 : vector<8x1xf32>
    %20 = math.rsqrt %19 : vector<8x1xf32>
    %21 = vector.broadcast %20 : vector<8x1xf32> to vector<8x32xf32>
    %22 = arith.mulf %12, %21 : vector<8x32xf32>
    %23 = vector.broadcast %5 : vector<8x1xf32> to vector<8x32xf32>
    %24 = arith.mulf %22, %23 : vector<8x32xf32>
    %25 = vector.broadcast %6 : vector<8x1xf32> to vector<8x32xf32>
    %26 = arith.addf %24, %25 : vector<8x32xf32>
    %c0_12 = arith.constant 0 : index
    %c0_13 = arith.constant 0 : index
    %27 = vector.load %arg5[%c0_12, %c0_13] : memref<8x32xf32, #tpu.memory_space<vmem>>, vector<8x32xf32>
    tpu.vector_store %arg5[%c0_12, %c0_13], %26 {strides = array<i32>} : memref<8x32xf32, #tpu.memory_space<vmem>>, vector<8x32xf32>,
    return
  }
  func.func @transform_0(%arg0: i32) -> (i32, i32) {
    %c0_i32 = arith.constant 0 : i32
    %c0_i32_0 = arith.constant 0 : i32
    %c0_i32_1 = arith.constant 0 : i32
    return %c0_i32, %c0_i32_0 : i32, i32
  }
  func.func @transform_1(%arg0: i32) -> (i32, i32) {
    %c0_i32 = arith.constant 0 : i32
    %c0_i32_0 = arith.constant 0 : i32
    %c0_i32_1 = arith.constant 0 : i32
    return %c0_i32, %c0_i32_0 : i32, i32
  }
  func.func @transform_2(%arg0: i32) -> (i32, i32) {
    %c0_i32 = arith.constant 0 : i32
    %c0_i32_0 = arith.constant 0 : i32
    %c0_i32_1 = arith.constant 0 : i32
    return %c0_i32, %c0_i32_0 : i32, i32
  }
  func.func @transform_3(%arg0: i32) -> (i32, i32) {
    %c0_i32 = arith.constant 0 : i32
    %c0_i32_0 = arith.constant 0 : i32
    %c0_i32_1 = arith.constant 0 : i32
    return %c0_i32, %c0_i32_0 : i32, i32
  }
  func.func @transform_4(%arg0: i32) -> (i32, i32) {
    %c0_i32 = arith.constant 0 : i32
    %c0_i32_0 = arith.constant 0 : i32
    %c0_i32_1 = arith.constant 0 : i32
    return %c0_i32, %c0_i32_0 : i32, i32
  }
}

module attributes {stable_mosaic.version = 11 : i64} {
  func.func @_residual_kernel(%arg0: i32, %arg1: memref<72x32xf32, #tpu.memory_space<vmem>>, %arg2: memref<8x72xf32, #tpu.memory_space<vmem>>, %arg3: memref<8x1xf32, #tpu.memory_space<vmem>>, %arg4: memref<8x1xf32, #tpu.memory_space<vmem>>, %arg5: memref<8x8xf32, #tpu.memory_space<vmem>>, %arg6: memref<8x1xf32, #tpu.memory_space<vmem>>, %arg7: memref<8x1xf32, #tpu.memory_space<vmem>>, %arg8: memref<8x32xf32, #tpu.memory_space<vmem>>, %arg9: memref<8x32xf32, #tpu.memory_space<vmem>>) attributes {dimension_semantics = [#tpu.dimension_semantics<arbitrary>], iteration_bounds = array<i64: 1>, scalar_prefetch = 0 : i64, scratch_operands = 0 : i64, tpu.core_type = #tpu.core_type<tc>, window_params = [{pipeline_mode = #tpu.pipeline_mode<synchronous>, transform_indices = @transform_0, window_bounds = array<i64: 72, 32>}, {pipeline_mode = #tpu.pipeline_mode<synchronous>, transform_indices = @transform_1, window_bounds = array<i64: 8, 72>}, {pipeline_mode = #tpu.pipeline_mode<synchronous>, transform_indices = @transform_2, window_bounds = array<i64: 8, 1>}, {pipeline_mode = #tpu.pipeline_mode<synchronous>, transform_indices = @transform_3, window_bounds = array<i64: 8, 1>}, {pipeline_mode = #tpu.pipeline_mode<synchronous>, transform_indices = @transform_4, window_bounds = array<i64: 8, 8>}, {pipeline_mode = #tpu.pipeline_mode<synchronous>, transform_indices = @transform_5, window_bounds = array<i64: 8, 1>}, {pipeline_mode = #tpu.pipeline_mode<synchronous>, transform_indices = @transform_6, window_bounds = array<i64: 8, 1>}, {pipeline_mode = #tpu.pipeline_mode<synchronous>, transform_indices = @transform_7, window_bounds = array<i64: 8, 32>}, {pipeline_mode = #tpu.pipeline_mode<synchronous>, transform_indices = @transform_8, window_bounds = array<i64: 8, 32>}]} {
    %c0 = arith.constant 0 : index
    %c0_0 = arith.constant 0 : index
    %0 = vector.load %arg1[%c0, %c0_0] : memref<72x32xf32, #tpu.memory_space<vmem>>, vector<72x32xf32>
    %cst = arith.constant 0.000000e+00 : f32
    %1 = vector.broadcast %cst : f32 to vector<72x32xf32>
    %2 = arith.maximumf %0, %1 : vector<72x32xf32>
    %c0_1 = arith.constant 0 : index
    %c0_2 = arith.constant 0 : index
    %3 = vector.load %arg2[%c0_1, %c0_2] : memref<8x72xf32, #tpu.memory_space<vmem>>, vector<8x72xf32>
    %4 = arith.truncf %3 : vector<8x72xf32> to vector<8x72xbf16>
    %5 = arith.truncf %2 : vector<72x32xf32> to vector<72x32xbf16>
    %cst_3 = arith.constant dense<0.000000e+00> : vector<8x32xf32>
    %6 = tpu.matmul %4, %5, %cst_3 {dimension_numbers = #tpu.dot_dimension_numbers<[1], [0], [0], [1], [0, 0, 1, 1], [], []>} : vector<8x72xbf16>, vector<72x32xbf16>, vector<8x32xf32> -> vector<8x32xf32>
    %c0_4 = arith.constant 0 : index
    %c0_5 = arith.constant 0 : index
    %7 = vector.load %arg3[%c0_4, %c0_5] : memref<8x1xf32, #tpu.memory_space<vmem>>, vector<8x1xf32>
    %c0_6 = arith.constant 0 : index
    %c0_7 = arith.constant 0 : index
    %8 = vector.load %arg4[%c0_6, %c0_7] : memref<8x1xf32, #tpu.memory_space<vmem>>, vector<8x1xf32>
    %cst_8 = arith.constant dense<0.000000e+00> : vector<8xf32>
    %9 = vector.multi_reduction <add>, %6, %cst_8 [1] : vector<8x32xf32> to vector<8xf32>
    %10 = vector.shape_cast %9 : vector<8xf32> to vector<8x1xf32>
    %cst_9 = arith.constant 3.125000e-02 : f32
    %11 = vector.broadcast %cst_9 : f32 to vector<8x1xf32>
    %12 = arith.mulf %10, %11 : vector<8x1xf32>
    %13 = vector.broadcast %12 : vector<8x1xf32> to vector<8x32xf32>
    %14 = arith.subf %6, %13 : vector<8x32xf32>
    %15 = arith.mulf %14, %14 : vector<8x32xf32>
    %cst_10 = arith.constant dense<0.000000e+00> : vector<8xf32>
    %16 = vector.multi_reduction <add>, %15, %cst_10 [1] : vector<8x32xf32> to vector<8xf32>
    %17 = vector.shape_cast %16 : vector<8xf32> to vector<8x1xf32>
    %cst_11 = arith.constant 3.125000e-02 : f32
    %18 = vector.broadcast %cst_11 : f32 to vector<8x1xf32>
    %19 = arith.mulf %17, %18 : vector<8x1xf32>
    %cst_12 = arith.constant 9.99999974E-6 : f32
    %20 = vector.broadcast %cst_12 : f32 to vector<8x1xf32>
    %21 = arith.addf %19, %20 : vector<8x1xf32>
    %22 = math.rsqrt %21 : vector<8x1xf32>
    %23 = vector.broadcast %22 : vector<8x1xf32> to vector<8x32xf32>
    %24 = arith.mulf %14, %23 : vector<8x32xf32>
    %25 = vector.broadcast %7 : vector<8x1xf32> to vector<8x32xf32>
    %26 = arith.mulf %24, %25 : vector<8x32xf32>
    %27 = vector.broadcast %8 : vector<8x1xf32> to vector<8x32xf32>
    %28 = arith.addf %26, %27 : vector<8x32xf32>
    %cst_13 = arith.constant 0.000000e+00 : f32
    %29 = vector.broadcast %cst_13 : f32 to vector<8x32xf32>
    %30 = arith.maximumf %28, %29 : vector<8x32xf32>
    %c0_14 = arith.constant 0 : index
    %c0_15 = arith.constant 0 : index
    %31 = vector.load %arg5[%c0_14, %c0_15] : memref<8x8xf32, #tpu.memory_space<vmem>>, vector<8x8xf32>
    %32 = arith.truncf %31 : vector<8x8xf32> to vector<8x8xbf16>
    %33 = arith.truncf %30 : vector<8x32xf32> to vector<8x32xbf16>
    %cst_16 = arith.constant dense<0.000000e+00> : vector<8x32xf32>
    %34 = tpu.matmul %32, %33, %cst_16 {dimension_numbers = #tpu.dot_dimension_numbers<[1], [0], [0], [1], [0, 0, 1, 1], [], []>} : vector<8x8xbf16>, vector<8x32xbf16>, vector<8x32xf32> -> vector<8x32xf32>
    %c0_17 = arith.constant 0 : index
    %c0_18 = arith.constant 0 : index
    %35 = vector.load %arg6[%c0_17, %c0_18] : memref<8x1xf32, #tpu.memory_space<vmem>>, vector<8x1xf32>
    %c0_19 = arith.constant 0 : index
    %c0_20 = arith.constant 0 : index
    %36 = vector.load %arg7[%c0_19, %c0_20] : memref<8x1xf32, #tpu.memory_space<vmem>>, vector<8x1xf32>
    %cst_21 = arith.constant dense<0.000000e+00> : vector<8xf32>
    %37 = vector.multi_reduction <add>, %34, %cst_21 [1] : vector<8x32xf32> to vector<8xf32>
    %38 = vector.shape_cast %37 : vector<8xf32> to vector<8x1xf32>
    %cst_22 = arith.constant 3.125000e-02 : f32
    %39 = vector.broadcast %cst_22 : f32 to vector<8x1xf32>
    %40 = arith.mulf %38, %39 : vector<8x1xf32>
    %41 = vector.broadcast %40 : vector<8x1xf32> to vector<8x32xf32>
    %42 = arith.subf %34, %41 : vector<8x32xf32>
    %43 = arith.mulf %42, %42 : vector<8x32xf32>
    %cst_23 = arith.constant dense<0.000000e+00> : vector<8xf32>
    %44 = vector.multi_reduction <add>, %43, %cst_23 [1] : vector<8x32xf32> to vector<8xf32>
    %45 = vector.shape_cast %44 : vector<8xf32> to vector<8x1xf32>
    %cst_24 = arith.constant 3.125000e-02 : f32
    %46 = vector.broadcast %cst_24 : f32 to vector<8x1xf32>
    %47 = arith.mulf %45, %46 : vector<8x1xf32>
    %cst_25 = arith.constant 9.99999974E-6 : f32
    %48 = vector.broadcast %cst_25 : f32 to vector<8x1xf32>
    %49 = arith.addf %47, %48 : vector<8x1xf32>
    %50 = math.rsqrt %49 : vector<8x1xf32>
    %51 = vector.broadcast %50 : vector<8x1xf32> to vector<8x32xf32>
    %52 = arith.mulf %42, %51 : vector<8x32xf32>
    %53 = vector.broadcast %35 : vector<8x1xf32> to vector<8x32xf32>
    %54 = arith.mulf %52, %53 : vector<8x32xf32>
    %55 = vector.broadcast %36 : vector<8x1xf32> to vector<8x32xf32>
    %56 = arith.addf %54, %55 : vector<8x32xf32>
    %c0_26 = arith.constant 0 : index
    %c0_27 = arith.constant 0 : index
    %57 = vector.load %arg8[%c0_26, %c0_27] : memref<8x32xf32, #tpu.memory_space<vmem>>, vector<8x32xf32>
    %58 = arith.addf %57, %56 : vector<8x32xf32>
    %c0_28 = arith.constant 0 : index
    %c0_29 = arith.constant 0 : index
    %59 = vector.load %arg9[%c0_28, %c0_29] : memref<8x32xf32, #tpu.memory_space<vmem>>, vector<8x32xf32>
    tpu.vector_store %arg9[%c0_28, %c0_29], %58 {strides = array<i32>} : memref<8x32xf32, #tpu.memory_space<vmem>>, vector<8x32xf32>,
    return
  }
  func.func @transform_0(%arg0: i32) -> (i32, i32) {
    %c0_i32 = arith.constant 0 : i32
    %c0_i32_0 = arith.constant 0 : i32
    %c0_i32_1 = arith.constant 0 : i32
    return %c0_i32, %c0_i32_0 : i32, i32
  }
  func.func @transform_1(%arg0: i32) -> (i32, i32) {
    %c0_i32 = arith.constant 0 : i32
    %c0_i32_0 = arith.constant 0 : i32
    %c0_i32_1 = arith.constant 0 : i32
    return %c0_i32, %c0_i32_0 : i32, i32
  }
  func.func @transform_2(%arg0: i32) -> (i32, i32) {
    %c0_i32 = arith.constant 0 : i32
    %c0_i32_0 = arith.constant 0 : i32
    %c0_i32_1 = arith.constant 0 : i32
    return %c0_i32, %c0_i32_0 : i32, i32
  }
  func.func @transform_3(%arg0: i32) -> (i32, i32) {
    %c0_i32 = arith.constant 0 : i32
    %c0_i32_0 = arith.constant 0 : i32
    %c0_i32_1 = arith.constant 0 : i32
    return %c0_i32, %c0_i32_0 : i32, i32
  }
  func.func @transform_4(%arg0: i32) -> (i32, i32) {
    %c0_i32 = arith.constant 0 : i32
    %c0_i32_0 = arith.constant 0 : i32
    %c0_i32_1 = arith.constant 0 : i32
    return %c0_i32, %c0_i32_0 : i32, i32
  }
  func.func @transform_5(%arg0: i32) -> (i32, i32) {
    %c0_i32 = arith.constant 0 : i32
    %c0_i32_0 = arith.constant 0 : i32
    %c0_i32_1 = arith.constant 0 : i32
    return %c0_i32, %c0_i32_0 : i32, i32
  }
  func.func @transform_6(%arg0: i32) -> (i32, i32) {
    %c0_i32 = arith.constant 0 : i32
    %c0_i32_0 = arith.constant 0 : i32
    %c0_i32_1 = arith.constant 0 : i32
    return %c0_i32, %c0_i32_0 : i32, i32
  }
  func.func @transform_7(%arg0: i32) -> (i32, i32) {
    %c0_i32 = arith.constant 0 : i32
    %c0_i32_0 = arith.constant 0 : i32
    %c0_i32_1 = arith.constant 0 : i32
    return %c0_i32, %c0_i32_0 : i32, i32
  }
  func.func @transform_8(%arg0: i32) -> (i32, i32) {
    %c0_i32 = arith.constant 0 : i32
    %c0_i32_0 = arith.constant 0 : i32
    %c0_i32_1 = arith.constant 0 : i32
    return %c0_i32, %c0_i32_0 : i32, i32
  }
}

module attributes {stable_mosaic.version = 11 : i64} {
  func.func @_residual_final_kernel(%arg0: i32, %arg1: memref<72x32xf32, #tpu.memory_space<vmem>>, %arg2: memref<8x72xf32, #tpu.memory_space<vmem>>, %arg3: memref<8x1xf32, #tpu.memory_space<vmem>>, %arg4: memref<8x1xf32, #tpu.memory_space<vmem>>, %arg5: memref<8x8xf32, #tpu.memory_space<vmem>>, %arg6: memref<8x1xf32, #tpu.memory_space<vmem>>, %arg7: memref<8x1xf32, #tpu.memory_space<vmem>>, %arg8: memref<8x32xf32, #tpu.memory_space<vmem>>, %arg9: memref<32x8xf32, #tpu.memory_space<vmem>>, %arg10: memref<32x1xf32, #tpu.memory_space<vmem>>, %arg11: memref<32x32xf32, #tpu.memory_space<vmem>>) attributes {dimension_semantics = [#tpu.dimension_semantics<arbitrary>], iteration_bounds = array<i64: 1>, scalar_prefetch = 0 : i64, scratch_operands = 0 : i64, tpu.core_type = #tpu.core_type<tc>, window_params = [{pipeline_mode = #tpu.pipeline_mode<synchronous>, transform_indices = @transform_0, window_bounds = array<i64: 72, 32>}, {pipeline_mode = #tpu.pipeline_mode<synchronous>, transform_indices = @transform_1, window_bounds = array<i64: 8, 72>}, {pipeline_mode = #tpu.pipeline_mode<synchronous>, transform_indices = @transform_2, window_bounds = array<i64: 8, 1>}, {pipeline_mode = #tpu.pipeline_mode<synchronous>, transform_indices = @transform_3, window_bounds = array<i64: 8, 1>}, {pipeline_mode = #tpu.pipeline_mode<synchronous>, transform_indices = @transform_4, window_bounds = array<i64: 8, 8>}, {pipeline_mode = #tpu.pipeline_mode<synchronous>, transform_indices = @transform_5, window_bounds = array<i64: 8, 1>}, {pipeline_mode = #tpu.pipeline_mode<synchronous>, transform_indices = @transform_6, window_bounds = array<i64: 8, 1>}, {pipeline_mode = #tpu.pipeline_mode<synchronous>, transform_indices = @transform_7, window_bounds = array<i64: 8, 32>}, {pipeline_mode = #tpu.pipeline_mode<synchronous>, transform_indices = @transform_8, window_bounds = array<i64: 32, 8>}, {pipeline_mode = #tpu.pipeline_mode<synchronous>, transform_indices = @transform_9, window_bounds = array<i64: 32, 1>}, {pipeline_mode = #tpu.pipeline_mode<synchronous>, transform_indices = @transform_10, window_bounds = array<i64: 32, 32>}]} {
    %c0 = arith.constant 0 : index
    %c0_0 = arith.constant 0 : index
    %0 = vector.load %arg1[%c0, %c0_0] : memref<72x32xf32, #tpu.memory_space<vmem>>, vector<72x32xf32>
    %cst = arith.constant 0.000000e+00 : f32
    %1 = vector.broadcast %cst : f32 to vector<72x32xf32>
    %2 = arith.maximumf %0, %1 : vector<72x32xf32>
    %c0_1 = arith.constant 0 : index
    %c0_2 = arith.constant 0 : index
    %3 = vector.load %arg2[%c0_1, %c0_2] : memref<8x72xf32, #tpu.memory_space<vmem>>, vector<8x72xf32>
    %4 = arith.truncf %3 : vector<8x72xf32> to vector<8x72xbf16>
    %5 = arith.truncf %2 : vector<72x32xf32> to vector<72x32xbf16>
    %cst_3 = arith.constant dense<0.000000e+00> : vector<8x32xf32>
    %6 = tpu.matmul %4, %5, %cst_3 {dimension_numbers = #tpu.dot_dimension_numbers<[1], [0], [0], [1], [0, 0, 1, 1], [], []>} : vector<8x72xbf16>, vector<72x32xbf16>, vector<8x32xf32> -> vector<8x32xf32>
    %c0_4 = arith.constant 0 : index
    %c0_5 = arith.constant 0 : index
    %7 = vector.load %arg3[%c0_4, %c0_5] : memref<8x1xf32, #tpu.memory_space<vmem>>, vector<8x1xf32>
    %c0_6 = arith.constant 0 : index
    %c0_7 = arith.constant 0 : index
    %8 = vector.load %arg4[%c0_6, %c0_7] : memref<8x1xf32, #tpu.memory_space<vmem>>, vector<8x1xf32>
    %cst_8 = arith.constant dense<0.000000e+00> : vector<8xf32>
    %9 = vector.multi_reduction <add>, %6, %cst_8 [1] : vector<8x32xf32> to vector<8xf32>
    %10 = vector.shape_cast %9 : vector<8xf32> to vector<8x1xf32>
    %cst_9 = arith.constant 3.125000e-02 : f32
    %11 = vector.broadcast %cst_9 : f32 to vector<8x1xf32>
    %12 = arith.mulf %10, %11 : vector<8x1xf32>
    %13 = vector.broadcast %12 : vector<8x1xf32> to vector<8x32xf32>
    %14 = arith.subf %6, %13 : vector<8x32xf32>
    %15 = arith.mulf %14, %14 : vector<8x32xf32>
    %cst_10 = arith.constant dense<0.000000e+00> : vector<8xf32>
    %16 = vector.multi_reduction <add>, %15, %cst_10 [1] : vector<8x32xf32> to vector<8xf32>
    %17 = vector.shape_cast %16 : vector<8xf32> to vector<8x1xf32>
    %cst_11 = arith.constant 3.125000e-02 : f32
    %18 = vector.broadcast %cst_11 : f32 to vector<8x1xf32>
    %19 = arith.mulf %17, %18 : vector<8x1xf32>
    %cst_12 = arith.constant 9.99999974E-6 : f32
    %20 = vector.broadcast %cst_12 : f32 to vector<8x1xf32>
    %21 = arith.addf %19, %20 : vector<8x1xf32>
    %22 = math.rsqrt %21 : vector<8x1xf32>
    %23 = vector.broadcast %22 : vector<8x1xf32> to vector<8x32xf32>
    %24 = arith.mulf %14, %23 : vector<8x32xf32>
    %25 = vector.broadcast %7 : vector<8x1xf32> to vector<8x32xf32>
    %26 = arith.mulf %24, %25 : vector<8x32xf32>
    %27 = vector.broadcast %8 : vector<8x1xf32> to vector<8x32xf32>
    %28 = arith.addf %26, %27 : vector<8x32xf32>
    %cst_13 = arith.constant 0.000000e+00 : f32
    %29 = vector.broadcast %cst_13 : f32 to vector<8x32xf32>
    %30 = arith.maximumf %28, %29 : vector<8x32xf32>
    %c0_14 = arith.constant 0 : index
    %c0_15 = arith.constant 0 : index
    %31 = vector.load %arg5[%c0_14, %c0_15] : memref<8x8xf32, #tpu.memory_space<vmem>>, vector<8x8xf32>
    %32 = arith.truncf %31 : vector<8x8xf32> to vector<8x8xbf16>
    %33 = arith.truncf %30 : vector<8x32xf32> to vector<8x32xbf16>
    %cst_16 = arith.constant dense<0.000000e+00> : vector<8x32xf32>
    %34 = tpu.matmul %32, %33, %cst_16 {dimension_numbers = #tpu.dot_dimension_numbers<[1], [0], [0], [1], [0, 0, 1, 1], [], []>} : vector<8x8xbf16>, vector<8x32xbf16>, vector<8x32xf32> -> vector<8x32xf32>
    %c0_17 = arith.constant 0 : index
    %c0_18 = arith.constant 0 : index
    %35 = vector.load %arg6[%c0_17, %c0_18] : memref<8x1xf32, #tpu.memory_space<vmem>>, vector<8x1xf32>
    %c0_19 = arith.constant 0 : index
    %c0_20 = arith.constant 0 : index
    %36 = vector.load %arg7[%c0_19, %c0_20] : memref<8x1xf32, #tpu.memory_space<vmem>>, vector<8x1xf32>
    %cst_21 = arith.constant dense<0.000000e+00> : vector<8xf32>
    %37 = vector.multi_reduction <add>, %34, %cst_21 [1] : vector<8x32xf32> to vector<8xf32>
    %38 = vector.shape_cast %37 : vector<8xf32> to vector<8x1xf32>
    %cst_22 = arith.constant 3.125000e-02 : f32
    %39 = vector.broadcast %cst_22 : f32 to vector<8x1xf32>
    %40 = arith.mulf %38, %39 : vector<8x1xf32>
    %41 = vector.broadcast %40 : vector<8x1xf32> to vector<8x32xf32>
    %42 = arith.subf %34, %41 : vector<8x32xf32>
    %43 = arith.mulf %42, %42 : vector<8x32xf32>
    %cst_23 = arith.constant dense<0.000000e+00> : vector<8xf32>
    %44 = vector.multi_reduction <add>, %43, %cst_23 [1] : vector<8x32xf32> to vector<8xf32>
    %45 = vector.shape_cast %44 : vector<8xf32> to vector<8x1xf32>
    %cst_24 = arith.constant 3.125000e-02 : f32
    %46 = vector.broadcast %cst_24 : f32 to vector<8x1xf32>
    %47 = arith.mulf %45, %46 : vector<8x1xf32>
    %cst_25 = arith.constant 9.99999974E-6 : f32
    %48 = vector.broadcast %cst_25 : f32 to vector<8x1xf32>
    %49 = arith.addf %47, %48 : vector<8x1xf32>
    %50 = math.rsqrt %49 : vector<8x1xf32>
    %51 = vector.broadcast %50 : vector<8x1xf32> to vector<8x32xf32>
    %52 = arith.mulf %42, %51 : vector<8x32xf32>
    %53 = vector.broadcast %35 : vector<8x1xf32> to vector<8x32xf32>
    %54 = arith.mulf %52, %53 : vector<8x32xf32>
    %55 = vector.broadcast %36 : vector<8x1xf32> to vector<8x32xf32>
    %56 = arith.addf %54, %55 : vector<8x32xf32>
    %c0_26 = arith.constant 0 : index
    %c0_27 = arith.constant 0 : index
    %57 = vector.load %arg8[%c0_26, %c0_27] : memref<8x32xf32, #tpu.memory_space<vmem>>, vector<8x32xf32>
    %58 = arith.addf %57, %56 : vector<8x32xf32>
    %c0_28 = arith.constant 0 : index
    %c0_29 = arith.constant 0 : index
    %59 = vector.load %arg9[%c0_28, %c0_29] : memref<32x8xf32, #tpu.memory_space<vmem>>, vector<32x8xf32>
    %60 = arith.truncf %59 : vector<32x8xf32> to vector<32x8xbf16>
    %61 = arith.truncf %58 : vector<8x32xf32> to vector<8x32xbf16>
    %cst_30 = arith.constant dense<0.000000e+00> : vector<32x32xf32>
    %62 = tpu.matmul %60, %61, %cst_30 {dimension_numbers = #tpu.dot_dimension_numbers<[1], [0], [0], [1], [0, 0, 1, 1], [], []>} : vector<32x8xbf16>, vector<8x32xbf16>, vector<32x32xf32> -> vector<32x32xf32>
    %c0_31 = arith.constant 0 : index
    %c0_32 = arith.constant 0 : index
    %63 = vector.load %arg10[%c0_31, %c0_32] : memref<32x1xf32, #tpu.memory_space<vmem>>, vector<32x1xf32>
    %64 = vector.broadcast %63 : vector<32x1xf32> to vector<32x32xf32>
    %65 = arith.addf %62, %64 : vector<32x32xf32>
    %c0_33 = arith.constant 0 : index
    %c0_34 = arith.constant 0 : index
    %66 = vector.load %arg11[%c0_33, %c0_34] : memref<32x32xf32, #tpu.memory_space<vmem>>, vector<32x32xf32>
    tpu.vector_store %arg11[%c0_33, %c0_34], %65 {strides = array<i32>} : memref<32x32xf32, #tpu.memory_space<vmem>>, vector<32x32xf32>,
    return
  }
  func.func @transform_0(%arg0: i32) -> (i32, i32) {
    %c0_i32 = arith.constant 0 : i32
    %c0_i32_0 = arith.constant 0 : i32
    %c0_i32_1 = arith.constant 0 : i32
    return %c0_i32, %c0_i32_0 : i32, i32
  }
  func.func @transform_1(%arg0: i32) -> (i32, i32) {
    %c0_i32 = arith.constant 0 : i32
    %c0_i32_0 = arith.constant 0 : i32
    %c0_i32_1 = arith.constant 0 : i32
    return %c0_i32, %c0_i32_0 : i32, i32
  }
  func.func @transform_2(%arg0: i32) -> (i32, i32) {
    %c0_i32 = arith.constant 0 : i32
    %c0_i32_0 = arith.constant 0 : i32
    %c0_i32_1 = arith.constant 0 : i32
    return %c0_i32, %c0_i32_0 : i32, i32
  }
  func.func @transform_3(%arg0: i32) -> (i32, i32) {
    %c0_i32 = arith.constant 0 : i32
    %c0_i32_0 = arith.constant 0 : i32
    %c0_i32_1 = arith.constant 0 : i32
    return %c0_i32, %c0_i32_0 : i32, i32
  }
  func.func @transform_4(%arg0: i32) -> (i32, i32) {
    %c0_i32 = arith.constant 0 : i32
    %c0_i32_0 = arith.constant 0 : i32
    %c0_i32_1 = arith.constant 0 : i32
    return %c0_i32, %c0_i32_0 : i32, i32
  }
  func.func @transform_5(%arg0: i32) -> (i32, i32) {
    %c0_i32 = arith.constant 0 : i32
    %c0_i32_0 = arith.constant 0 : i32
    %c0_i32_1 = arith.constant 0 : i32
    return %c0_i32, %c0_i32_0 : i32, i32
  }
  func.func @transform_6(%arg0: i32) -> (i32, i32) {
    %c0_i32 = arith.constant 0 : i32
    %c0_i32_0 = arith.constant 0 : i32
    %c0_i32_1 = arith.constant 0 : i32
    return %c0_i32, %c0_i32_0 : i32, i32
  }
  func.func @transform_7(%arg0: i32) -> (i32, i32) {
    %c0_i32 = arith.constant 0 : i32
    %c0_i32_0 = arith.constant 0 : i32
    %c0_i32_1 = arith.constant 0 : i32
    return %c0_i32, %c0_i32_0 : i32, i32
  }
  func.func @transform_8(%arg0: i32) -> (i32, i32) {
    %c0_i32 = arith.constant 0 : i32
    %c0_i32_0 = arith.constant 0 : i32
    %c0_i32_1 = arith.constant 0 : i32
    return %c0_i32, %c0_i32_0 : i32, i32
  }
  func.func @transform_9(%arg0: i32) -> (i32, i32) {
    %c0_i32 = arith.constant 0 : i32
    %c0_i32_0 = arith.constant 0 : i32
    %c0_i32_1 = arith.constant 0 : i32
    return %c0_i32, %c0_i32_0 : i32, i32
  }
  func.func @transform_10(%arg0: i32) -> (i32, i32) {
    %c0_i32 = arith.constant 0 : i32
    %c0_i32_0 = arith.constant 0 : i32
    %c0_i32_1 = arith.constant 0 : i32
    return %c0_i32, %c0_i32_0 : i32, i32
  }
}

</mosaic_0001>

<llo_original>
// kernel: encoder_forward_pallas.5
$region0: #{encoder_forward_pallas.5}
  #allocation0 [shape = 'u32[]', space=smem, size = 0x4, offset = 0x4, fixed_abs, tag = 'smem constant byte address 0x4 - core index']
  #allocation1 [shape = 'u32[144,128]{1,0:T(1,128)}', space=vmem, size = 0x12000, scoped, tag = 'internal scratch']
  %s0 = inlined_call_operand.vmem [shape: f32[16,512], index: 0, kind: input, shape index: {}]
  %s1 = inlined_call_operand.vmem [shape: f32[8,16], index: 1, kind: input, shape index: {}]
  %s2 = inlined_call_operand.vmem [shape: f32[8,1], index: 2, kind: input, shape index: {}]
  %s3 = inlined_call_operand.vmem [shape: f32[8,1], index: 3, kind: input, shape index: {}]
  %s4 = inlined_call_operand.vmem [shape: f32[8,512], index: 4, kind: output, shape index: {}]
  %s5 = sld [smem:[#allocation0]]
  $region26: #{encoder_forward_pallas.5} parent=0
    _
  %s7 = ssub.s32 1, %s5
  %s8 = scalar_select 0, %s7, %s5
  // Predicated region
  $region2: #{encoder_forward_pallas.5} parent=0 // pred_check
    _
  $region3: #{encoder_forward_pallas.5} parent=0 // pred_check_branch
    %10 = sbr.rel (0) target = $region5
  $region4: #{encoder_forward_pallas.5} parent=0 // pred_region
    _
  $region5: #{encoder_forward_pallas.5} parent=0 // pred_fallthru
    _
  // Predicated region
  $region6: #{encoder_forward_pallas.5} parent=0 // pred_check
    _
  $region7: #{encoder_forward_pallas.5} parent=0 // pred_check_branch
    %12 = sbr.rel (0) target = $region9
  $region8: #{encoder_forward_pallas.5} parent=0 // pred_region
    _
  $region9: #{encoder_forward_pallas.5} parent=0 // pred_fallthru
    _
  // Predicated region
  $region10: #{encoder_forward_pallas.5} parent=0 // pred_check
    _
  $region11: #{encoder_forward_pallas.5} parent=0 // pred_check_branch
    %14 = sbr.rel (0) target = $region13
  $region12: #{encoder_forward_pallas.5} parent=0 // pred_region
    _
  $region13: #{encoder_forward_pallas.5} parent=0 // pred_fallthru
    _
  // Predicated region
  $region14: #{encoder_forward_pallas.5} parent=0 // pred_check
    _
  $region15: #{encoder_forward_pallas.5} parent=0 // pred_check_branch
    %16 = sbr.rel (0) target = $region17
  $region16: #{encoder_forward_pallas.5} parent=0 // pred_region
    _
  $region17: #{encoder_forward_pallas.5} parent=0 // pred_fallthru
    _
  %v18 = vld [vmem:[%s1] sm:$0xff]
  %v19 = vld [vmem:[%s0] sm:$0xff]
  %v20 = vld [vmem:[%s0 + $0x8] sm:$0xff]
  %v21 = vld [vmem:[%s0 + $0x10] sm:$0xff]
  %v22 = vld [vmem:[%s0 + $0x18] sm:$0xff]
  %v23 = vld [vmem:[%s0 + $0x20] sm:$0xff]
  %v24 = vld [vmem:[%s0 + $0x28] sm:$0xff]
  %v25 = vld [vmem:[%s0 + $0x30] sm:$0xff]
  %v26 = vld [vmem:[%s0 + $0x38] sm:$0xff]
  %v27 = vpack.c.bf16 %v18, %v18
  %v28 = vpack.c.bf16 %v23, %v19
  %v29 = vpack.c.bf16 %v24, %v20
  %v30 = vpack.c.bf16 %v25, %v21
  %v31 = vpack.c.bf16 %v26, %v22
  %vm32 = vcmask 130048
  %v34 = vsel %vm32, %v27, 0
  %36 = vmatprep.subr.bf16.mxu0 %v29
  %37 = vmatpush1.bf16.msra.mxu0 %v28
  %38 = vmatprep.subr.bf16.mxu0 0
  %39 = vmatpush1.bf16.msra.mxu0 0
  %40 = vmatprep.subr.bf16.mxu0 0
  %41 = vmatpush1.bf16.msra.mxu0 0
  %42 = vmatprep.subr.bf16.mxu0 0
  %43 = vmatpush1.bf16.msra.mxu0 0
  %44 = vmatprep.subr.bf16.mxu0 0
  %45 = vmatpush1.bf16.msra.mxu0 0
  %46 = vmatprep.subr.bf16.mxu0 0
  %47 = vmatpush1.bf16.msra.mxu0 0
  %48 = vmatprep.subr.bf16.mxu0 0
  %49 = vmatpush1.bf16.msra.mxu0 0
  %50 = vmatprep.subr.bf16.mxu0 0
  %51 = vmatpush1.bf16.msra.mxu0 0
  %52 = vmatprep.subr.bf16.mxu0 0
  %53 = vmatpush1.bf16.msra.mxu0 0
  %54 = vmatprep.subr.bf16.mxu0 0
  %55 = vmatpush1.bf16.msra.mxu0 0
  %56 = vmatprep.subr.bf16.mxu0 0
  %57 = vmatpush1.bf16.msra.mxu0 0
  %58 = vmatprep.subr.bf16.mxu0 0
  %59 = vmatpush1.bf16.msra.mxu0 0
  %60 = vmatprep.subr.bf16.mxu0 0
  %61 = vmatpush1.bf16.msra.mxu0 0
  %62 = vmatprep.subr.bf16.mxu0 0
  %63 = vmatpush1.bf16.msra.mxu0 0
  %64 = vmatprep.subr.bf16.mxu0 0
  %65 = vmatpush1.bf16.msra.mxu0 0
  %66 = vmatprep.subr.bf16.mxu0 0
  %67 = vmatpush1.bf16.msra.mxu0 0
  %68 = vmatprep.mubr.bf16.mxu0 0
  %69 = vmatmul.mubr.bf16.gmra.mrb[0].mxu0 %v34
  %v70 = vpop.f32.mrb[0].mxu0
  %v71 = vadd.f32 0.0, %v70
  %v72 = vpop.f32.mrb[0].mxu0
  %v73 = vadd.f32 0.0, %v72
  %v74 = vpop.f32.mrb[0].mxu0
  %v75 = vpop.f32.mrb[0].mxu0
  %76 = vdwg.mxu0
  %77 = vmatprep.subr.bf16.mxu0 %v31
  %78 = vmatpush1.bf16.msra.mxu0 %v30
  %79 = vmatprep.subr.bf16.mxu0 0
  %80 = vmatpush1.bf16.msra.mxu0 0
  %81 = vmatprep.subr.bf16.mxu0 0
  %82 = vmatpush1.bf16.msra.mxu0 0
  %83 = vmatprep.subr.bf16.mxu0 0
  %84 = vmatpush1.bf16.msra.mxu0 0
  %85 = vmatprep.subr.bf16.mxu0 0
  %86 = vmatpush1.bf16.msra.mxu0 0
  %87 = vmatprep.subr.bf16.mxu0 0
  %88 = vmatpush1.bf16.msra.mxu0 0
  %89 = vmatprep.subr.bf16.mxu0 0
  %90 = vmatpush1.bf16.msra.mxu0 0
  %91 = vmatprep.subr.bf16.mxu0 0
  %92 = vmatpush1.bf16.msra.mxu0 0
  %93 = vmatprep.subr.bf16.mxu0 0
  %94 = vmatpush1.bf16.msra.mxu0 0
  %95 = vmatprep.subr.bf16.mxu0 0
  %96 = vmatpush1.bf16.msra.mxu0 0
  %97 = vmatprep.subr.bf16.mxu0 0
  %98 = vmatpush1.bf16.msra.mxu0 0
  %99 = vmatprep.subr.bf16.mxu0 0
  %100 = vmatpush1.bf16.msra.mxu0 0
  %101 = vmatprep.subr.bf16.mxu0 0
  %102 = vmatpush1.bf16.msra.mxu0 0
  %103 = vmatprep.subr.bf16.mxu0 0
  %104 = vmatpush1.bf16.msra.mxu0 0
  %105 = vmatprep.subr.bf16.mxu0 0
  %106 = vmatpush1.bf16.msra.mxu0 0
  %107 = vmatprep.subr.bf16.mxu0 0
  %108 = vmatpush1.bf16.msra.mxu0 0
  %109 = vmatprep.mubr.bf16.mxu0 0
  %110 = vmatmul.mubr.bf16.gmra.mrb[0].mxu0 %v34
  %v111 = vpop.f32.mrb[0].mxu0
  %v112 = vadd.f32 0.0, %v111
  %v113 = vpop.f32.mrb[0].mxu0
  %v114 = vadd.f32 0.0, %v113
  %v115 = vpop.f32.mrb[0].mxu0
  %v116 = vpop.f32.mrb[0].mxu0
  %117 = vdwg.mxu0
  %v118 = vld [vmem:[%s2] sm:$0xff]
  %v119 = vld [vmem:[%s3] sm:$0xff]
  %v120 = vadd.f32 %v71, %v73
  %v121 = vadd.f32 %v120, %v112
  %v122 = vadd.f32 %v121, %v114
  %123 = vadd.xlane.f32.xlu0 %v122
  %v124 = vpop.xlane.xlu0 %123
  %v125 = vmul.f32 %v124, 0.001953125
  %v126 = vsub.f32 %v71, %v125
  %v127 = vsub.f32 %v73, %v125
  %v128 = vsub.f32 %v112, %v125
  %v129 = vsub.f32 %v114, %v125
  %v130 = vmul.f32 %v126, %v126
  %v131 = vmul.f32 %v127, %v127
  %v132 = vmul.f32 %v128, %v128
  %v133 = vmul.f32 %v129, %v129
  %v134 = vadd.f32 %v130, %v131
  %v135 = vadd.f32 %v134, %v132
  %v136 = vadd.f32 %v135, %v133
  %137 = vadd.xlane.f32.xlu0 %v136
  %v138 = vpop.xlane.xlu0 %137
  %v139 = vmul.f32 %v138, 0.001953125
  %v140 = vadd.f32 %v139, 1e-05
  %v141 = vrsqrt.pop %v140
  %v142 = vmul.f32 %v126, %v141
  %v143 = vmul.f32 %v127, %v141
  %v144 = vmul.f32 %v128, %v141
  %v145 = vmul.f32 %v129, %v141
  %147 = vset.pattern.permute.xlu0 0
  %148 = vperm.xlu0 %147, %v118
  %v149 = vpop.permute.xlu0 %148
  %v151 = vmul.f32 %v142, %v149
  %v152 = vmul.f32 %v143, %v149
  %v153 = vmul.f32 %v144, %v149
  %v154 = vmul.f32 %v145, %v149
  %156 = vset.pattern.permute.xlu0 0
  %157 = vperm.xlu0 %156, %v119
  %v158 = vpop.permute.xlu0 %157
  %v160 = vadd.f32 %v151, %v158
  %v161 = vadd.f32 %v152, %v158
  %v162 = vadd.f32 %v153, %v158
  %v163 = vadd.f32 %v154, %v158
  %v164 = vmax.f32 %v160, 0.0
  %v165 = vmax.f32 %v161, 0.0
  %v166 = vmax.f32 %v162, 0.0
  %v167 = vmax.f32 %v163, 0.0
  %168 = vst [vmem:[%s4] sm:$0xff] %v164
  %169 = vst [vmem:[%s4 + $0x8] sm:$0xff] %v165
  %170 = vst [vmem:[%s4 + $0x10] sm:$0xff] %v166
  %171 = vst [vmem:[%s4 + $0x18] sm:$0xff] %v167
  // Predicated region
  $region18: #{encoder_forward_pallas.5} parent=0 // pred_check
    _
  $region19: #{encoder_forward_pallas.5} parent=0 // pred_check_branch
    %173 = sbr.rel (0) target = $region21
  $region20: #{encoder_forward_pallas.5} parent=0 // pred_region
    _
  $region21: #{encoder_forward_pallas.5} parent=0 // pred_fallthru
    _
  // Predicated region
  $region22: #{encoder_forward_pallas.5} parent=0 // pred_check
    _
  $region23: #{encoder_forward_pallas.5} parent=0 // pred_check_branch
    %175 = sbr.rel (0) target = $region25
  $region24: #{encoder_forward_pallas.5} parent=0 // pred_region
    _
  $region25: #{encoder_forward_pallas.5} parent=0 // pred_fallthru
    _

// kernel: encoder_forward_pallas.6
$region0: #{encoder_forward_pallas.6}
  #allocation0 [shape = 'u32[]', space=smem, size = 0x4, offset = 0x4, fixed_abs, tag = 'smem constant byte address 0x4 - core index']
  #allocation1 [shape = 'u32[144,128]{1,0:T(1,128)}', space=vmem, size = 0x12000, scoped, tag = 'internal scratch']
  %s0 = inlined_call_operand.vmem [shape: f32[128,128], index: 0, kind: input, shape index: {}]
  %s1 = inlined_call_operand.vmem [shape: f32[8,128], index: 1, kind: input, shape index: {}]
  %s2 = inlined_call_operand.vmem [shape: f32[8,1], index: 2, kind: input, shape index: {}]
  %s3 = inlined_call_operand.vmem [shape: f32[8,1], index: 3, kind: input, shape index: {}]
  %s4 = inlined_call_operand.vmem [shape: f32[8,128], index: 4, kind: output, shape index: {}]
  %s5 = sld [smem:[#allocation0]]
  $region26: #{encoder_forward_pallas.6} parent=0
    _
  %s7 = ssub.s32 1, %s5
  %s8 = scalar_select 0, %s7, %s5
  // Predicated region
  $region2: #{encoder_forward_pallas.6} parent=0 // pred_check
    _
  $region3: #{encoder_forward_pallas.6} parent=0 // pred_check_branch
    %10 = sbr.rel (0) target = $region5
  $region4: #{encoder_forward_pallas.6} parent=0 // pred_region
    _
  $region5: #{encoder_forward_pallas.6} parent=0 // pred_fallthru
    _
  // Predicated region
  $region6: #{encoder_forward_pallas.6} parent=0 // pred_check
    _
  $region7: #{encoder_forward_pallas.6} parent=0 // pred_check_branch
    %12 = sbr.rel (0) target = $region9
  $region8: #{encoder_forward_pallas.6} parent=0 // pred_region
    _
  $region9: #{encoder_forward_pallas.6} parent=0 // pred_fallthru
    _
  // Predicated region
  $region10: #{encoder_forward_pallas.6} parent=0 // pred_check
    _
  $region11: #{encoder_forward_pallas.6} parent=0 // pred_check_branch
    %14 = sbr.rel (0) target = $region13
  $region12: #{encoder_forward_pallas.6} parent=0 // pred_region
    _
  $region13: #{encoder_forward_pallas.6} parent=0 // pred_fallthru
    _
  // Predicated region
  $region14: #{encoder_forward_pallas.6} parent=0 // pred_check
    _
  $region15: #{encoder_forward_pallas.6} parent=0 // pred_check_branch
    %16 = sbr.rel (0) target = $region17
  $region16: #{encoder_forward_pallas.6} parent=0 // pred_region
    _
  $region17: #{encoder_forward_pallas.6} parent=0 // pred_fallthru
    _
  %v18 = vld [vmem:[%s1] sm:$0xff]
  %v19 = vld [vmem:[%s0] sm:$0xff]
  %v20 = vld [vmem:[%s0 + $0x8] sm:$0xff]
  %v21 = vld [vmem:[%s0 + $0x10] sm:$0xff]
  %v22 = vld [vmem:[%s0 + $0x18] sm:$0xff]
  %v23 = vld [vmem:[%s0 + $0x20] sm:$0xff]
  %v24 = vld [vmem:[%s0 + $0x28] sm:$0xff]
  %v25 = vld [vmem:[%s0 + $0x30] sm:$0xff]
  %v26 = vld [vmem:[%s0 + $0x38] sm:$0xff]
  %v27 = vld [vmem:[%s0 + $0x40] sm:$0xff]
  %v28 = vld [vmem:[%s0 + $0x48] sm:$0xff]
  %v29 = vld [vmem:[%s0 + $0x50] sm:$0xff]
  %v30 = vld [vmem:[%s0 + $0x58] sm:$0xff]
  %v31 = vld [vmem:[%s0 + $0x60] sm:$0xff]
  %v32 = vld [vmem:[%s0 + $0x68] sm:$0xff]
  %v33 = vld [vmem:[%s0 + $0x70] sm:$0xff]
  %v34 = vld [vmem:[%s0 + $0x78] sm:$0xff]
  %v35 = vpack.c.bf16 %v18, %v18
  %v36 = vpack.c.bf16 %v20, %v19
  %v37 = vpack.c.bf16 %v22, %v21
  %v38 = vpack.c.bf16 %v24, %v23
  %v39 = vpack.c.bf16 %v26, %v25
  %v40 = vpack.c.bf16 %v28, %v27
  %v41 = vpack.c.bf16 %v30, %v29
  %v42 = vpack.c.bf16 %v32, %v31
  %v43 = vpack.c.bf16 %v34, %v33
  %44 = vmatprep.subr.bf16.mxu0 0
  %45 = vmatpush1.bf16.msra.mxu0 %v36
  %46 = vmatprep.subr.bf16.mxu0 0
  %47 = vmatpush1.bf16.msra.mxu0 %v37
  %48 = vmatprep.subr.bf16.mxu0 0
  %49 = vmatpush1.bf16.msra.mxu0 %v38
  %50 = vmatprep.subr.bf16.mxu0 0
  %51 = vmatpush1.bf16.msra.mxu0 %v39
  %52 = vmatprep.subr.bf16.mxu0 0
  %53 = vmatpush1.bf16.msra.mxu0 %v40
  %54 = vmatprep.subr.bf16.mxu0 0
  %55 = vmatpush1.bf16.msra.mxu0 %v41
  %56 = vmatprep.subr.bf16.mxu0 0
  %57 = vmatpush1.bf16.msra.mxu0 %v42
  %58 = vmatprep.subr.bf16.mxu0 0
  %59 = vmatpush1.bf16.msra.mxu0 %v43
  %60 = vmatprep.subr.bf16.mxu0 0
  %61 = vmatpush1.bf16.msra.mxu0 0
  %62 = vmatprep.subr.bf16.mxu0 0
  %63 = vmatpush1.bf16.msra.mxu0 0
  %64 = vmatprep.subr.bf16.mxu0 0
  %65 = vmatpush1.bf16.msra.mxu0 0
  %66 = vmatprep.subr.bf16.mxu0 0
  %67 = vmatpush1.bf16.msra.mxu0 0
  %68 = vmatprep.subr.bf16.mxu0 0
  %69 = vmatpush1.bf16.msra.mxu0 0
  %70 = vmatprep.subr.bf16.mxu0 0
  %71 = vmatpush1.bf16.msra.mxu0 0
  %72 = vmatprep.subr.bf16.mxu0 0
  %73 = vmatpush1.bf16.msra.mxu0 0
  %74 = vmatprep.subr.bf16.mxu0 0
  %75 = vmatpush1.bf16.msra.mxu0 0
  %76 = vmatprep.mubr.bf16.mxu0 0
  %77 = vmatmul.mubr.bf16.gmra.mrb[0].mxu0 %v35
  %v78 = vpop.f32.mrb[0].mxu0
  %v79 = vadd.f32 0.0, %v78
  %v80 = vpop.f32.mrb[0].mxu0
  %v81 = vpop.f32.mrb[0].mxu0
  %v82 = vpop.f32.mrb[0].mxu0
  %83 = vdwg.mxu0
  %v84 = vld [vmem:[%s2] sm:$0xff]
  %v85 = vld [vmem:[%s3] sm:$0xff]
  %86 = vadd.xlane.f32.xlu0 %v79
  %v87 = vpop.xlane.xlu0 %86
  %v88 = vmul.f32 %v87, 0.0078125
  %v89 = vsub.f32 %v79, %v88
  %v90 = vmul.f32 %v89, %v89
  %91 = vadd.xlane.f32.xlu0 %v90
  %v92 = vpop.xlane.xlu0 %91
  %v93 = vmul.f32 %v92, 0.0078125
  %v94 = vadd.f32 %v93, 1e-05
  %v95 = vrsqrt.pop %v94
  %v96 = vmul.f32 %v89, %v95
  %98 = vset.pattern.permute.xlu0 0
  %99 = vperm.xlu0 %98, %v84
  %v100 = vpop.permute.xlu0 %99
  %v102 = vmul.f32 %v96, %v100
  %104 = vset.pattern.permute.xlu0 0
  %105 = vperm.xlu0 %104, %v85
  %v106 = vpop.permute.xlu0 %105
  %v108 = vadd.f32 %v102, %v106
  %109 = vst [vmem:[%s4] sm:$0xff] %v108
  // Predicated region
  $region18: #{encoder_forward_pallas.6} parent=0 // pred_check
    _
  $region19: #{encoder_forward_pallas.6} parent=0 // pred_check_branch
    %111 = sbr.rel (0) target = $region21
  $region20: #{encoder_forward_pallas.6} parent=0 // pred_region
    _
  $region21: #{encoder_forward_pallas.6} parent=0 // pred_fallthru
    _
  // Predicated region
  $region22: #{encoder_forward_pallas.6} parent=0 // pred_check
    _
  $region23: #{encoder_forward_pallas.6} parent=0 // pred_check_branch
    %113 = sbr.rel (0) target = $region25
  $region24: #{encoder_forward_pallas.6} parent=0 // pred_region
    _
  $region25: #{encoder_forward_pallas.6} parent=0 // pred_fallthru
    _

// kernel: encoder_forward_pallas.7
$region0: #{encoder_forward_pallas.7}
  #allocation0 [shape = 'u32[]', space=smem, size = 0x4, offset = 0x4, fixed_abs, tag = 'smem constant byte address 0x4 - core index']
  #allocation1 [shape = 'u32[144,128]{1,0:T(1,128)}', space=vmem, size = 0x12000, scoped, tag = 'internal scratch']
  %s0 = inlined_call_operand.vmem [shape: f32[72,32], index: 0, kind: input, shape index: {}]
  %s1 = inlined_call_operand.vmem [shape: f32[8,72], index: 1, kind: input, shape index: {}]
  %s2 = inlined_call_operand.vmem [shape: f32[8,1], index: 2, kind: input, shape index: {}]
  %s3 = inlined_call_operand.vmem [shape: f32[8,1], index: 3, kind: input, shape index: {}]
  %s4 = inlined_call_operand.vmem [shape: f32[8,32], index: 4, kind: output, shape index: {}]
  %s5 = sld [smem:[#allocation0]]
  $region26: #{encoder_forward_pallas.7} parent=0
    _
  %s7 = ssub.s32 1, %s5
  %s8 = scalar_select 0, %s7, %s5
  // Predicated region
  $region2: #{encoder_forward_pallas.7} parent=0 // pred_check
    _
  $region3: #{encoder_forward_pallas.7} parent=0 // pred_check_branch
    %10 = sbr.rel (0) target = $region5
  $region4: #{encoder_forward_pallas.7} parent=0 // pred_region
    _
  $region5: #{encoder_forward_pallas.7} parent=0 // pred_fallthru
    _
  // Predicated region
  $region6: #{encoder_forward_pallas.7} parent=0 // pred_check
    _
  $region7: #{encoder_forward_pallas.7} parent=0 // pred_check_branch
    %12 = sbr.rel (0) target = $region9
  $region8: #{encoder_forward_pallas.7} parent=0 // pred_region
    _
  $region9: #{encoder_forward_pallas.7} parent=0 // pred_fallthru
    _
  // Predicated region
  $region10: #{encoder_forward_pallas.7} parent=0 // pred_check
    _
  $region11: #{encoder_forward_pallas.7} parent=0 // pred_check_branch
    %14 = sbr.rel (0) target = $region13
  $region12: #{encoder_forward_pallas.7} parent=0 // pred_region
    _
  $region13: #{encoder_forward_pallas.7} parent=0 // pred_fallthru
    _
  // Predicated region
  $region14: #{encoder_forward_pallas.7} parent=0 // pred_check
    _
  $region15: #{encoder_forward_pallas.7} parent=0 // pred_check_branch
    %16 = sbr.rel (0) target = $region17
  $region16: #{encoder_forward_pallas.7} parent=0 // pred_region
    _
  $region17: #{encoder_forward_pallas.7} parent=0 // pred_fallthru
    _
  %v18 = vld [vmem:[%s1] sm:$0xff]
  %v19 = vld [vmem:[%s0] sm:$0xff]
  %v20 = vld [vmem:[%s0 + $0x8] sm:$0xff]
  %v21 = vld [vmem:[%s0 + $0x10] sm:$0xff]
  %v22 = vld [vmem:[%s0 + $0x18] sm:$0xff]
  %v23 = vld [vmem:[%s0 + $0x20] sm:$0xff]
  %v24 = vld [vmem:[%s0 + $0x28] sm:$0xff]
  %v25 = vld [vmem:[%s0 + $0x30] sm:$0xff]
  %v26 = vld [vmem:[%s0 + $0x38] sm:$0xff]
  %v27 = vld [vmem:[%s0 + $0x40] sm:$0xff]
  %v28 = vpack.c.bf16 %v18, %v18
  %v29 = vpack.c.bf16 %v20, %v19
  %v30 = vpack.c.bf16 %v22, %v21
  %v31 = vpack.c.bf16 %v24, %v23
  %v32 = vpack.c.bf16 %v26, %v25
  %v33 = vpack.c.bf16 %v27, %v27
  %vm34 = vcmask 588800
  %v36 = vsel %vm34, %v28, 0
  %vm38 = vcmask 1043456
  %v40 = vsel %vm38, %v33, 0
  %42 = vmatprep.subr.bf16.mxu0 0
  %43 = vmatpush1.bf16.msra.mxu0 %v29
  %44 = vmatprep.subr.bf16.mxu0 0
  %45 = vmatpush1.bf16.msra.mxu0 %v30
  %46 = vmatprep.subr.bf16.mxu0 0
  %47 = vmatpush1.bf16.msra.mxu0 %v31
  %48 = vmatprep.subr.bf16.mxu0 0
  %49 = vmatpush1.bf16.msra.mxu0 %v32
  %50 = vmatprep.subr.bf16.mxu0 0
  %51 = vmatpush1.bf16.msra.mxu0 %v40
  %52 = vmatprep.subr.bf16.mxu0 0
  %53 = vmatpush1.bf16.msra.mxu0 0
  %54 = vmatprep.subr.bf16.mxu0 0
  %55 = vmatpush1.bf16.msra.mxu0 0
  %56 = vmatprep.subr.bf16.mxu0 0
  %57 = vmatpush1.bf16.msra.mxu0 0
  %58 = vmatprep.subr.bf16.mxu0 0
  %59 = vmatpush1.bf16.msra.mxu0 0
  %60 = vmatprep.subr.bf16.mxu0 0
  %61 = vmatpush1.bf16.msra.mxu0 0
  %62 = vmatprep.subr.bf16.mxu0 0
  %63 = vmatpush1.bf16.msra.mxu0 0
  %64 = vmatprep.subr.bf16.mxu0 0
  %65 = vmatpush1.bf16.msra.mxu0 0
  %66 = vmatprep.subr.bf16.mxu0 0
  %67 = vmatpush1.bf16.msra.mxu0 0
  %68 = vmatprep.subr.bf16.mxu0 0
  %69 = vmatpush1.bf16.msra.mxu0 0
  %70 = vmatprep.subr.bf16.mxu0 0
  %71 = vmatpush1.bf16.msra.mxu0 0
  %72 = vmatprep.subr.bf16.mxu0 0
  %73 = vmatpush1.bf16.msra.mxu0 0
  %74 = vmatprep.mubr.bf16.mxu0 0
  %75 = vmatmul.mubr.bf16.gmra.mrb[0].mxu0 %v36
  %v76 = vpop.f32.mrb[0].mxu0
  %v77 = vadd.f32 0.0, %v76
  %v78 = vpop.f32.mrb[0].mxu0
  %v79 = vpop.f32.mrb[0].mxu0
  %v80 = vpop.f32.mrb[0].mxu0
  %81 = vdwg.mxu0
  %v82 = vld [vmem:[%s2] sm:$0xff]
  %v83 = vld [vmem:[%s3] sm:$0xff]
  %vm84 = vcmask 261120
  %v85 = vsel %vm84, %v77, 0.0
  %86 = vadd.xlane.f32.xlu0 %v85
  %v87 = vpop.xlane.xlu0 %86
  %v88 = vmul.f32 %v87, 0.03125
  %v89 = vsub.f32 %v77, %v88
  %v90 = vmul.f32 %v89, %v89
  %v91 = vsel %vm84, %v90, 0.0
  %92 = vadd.xlane.f32.xlu0 %v91
  %v93 = vpop.xlane.xlu0 %92
  %v94 = vmul.f32 %v93, 0.03125
  %v95 = vadd.f32 %v94, 1e-05
  %v96 = vrsqrt.pop %v95
  %v97 = vmul.f32 %v89, %v96
  %99 = vset.pattern.permute.xlu0 0
  %100 = vperm.xlu0 %99, %v82
  %v101 = vpop.permute.xlu0 %100
  %v103 = vmul.f32 %v97, %v101
  %105 = vset.pattern.permute.xlu0 0
  %106 = vperm.xlu0 %105, %v83
  %v107 = vpop.permute.xlu0 %106
  %v109 = vadd.f32 %v103, %v107
  %110 = vst.msk [vmem:[%s4] sm:$0xff] %vm84, %v109
  // Predicated region
  $region18: #{encoder_forward_pallas.7} parent=0 // pred_check
    _
  $region19: #{encoder_forward_pallas.7} parent=0 // pred_check_branch
    %112 = sbr.rel (0) target = $region21
  $region20: #{encoder_forward_pallas.7} parent=0 // pred_region
    _
  $region21: #{encoder_forward_pallas.7} parent=0 // pred_fallthru
    _
  // Predicated region
  $region22: #{encoder_forward_pallas.7} parent=0 // pred_check
    _
  $region23: #{encoder_forward_pallas.7} parent=0 // pred_check_branch
    %114 = sbr.rel (0) target = $region25
  $region24: #{encoder_forward_pallas.7} parent=0 // pred_region
    _
  $region25: #{encoder_forward_pallas.7} parent=0 // pred_fallthru
    _

// kernel: encoder_forward_pallas.8
$region0: #{encoder_forward_pallas.8}
  #allocation0 [shape = 'u32[]', space=smem, size = 0x4, offset = 0x4, fixed_abs, tag = 'smem constant byte address 0x4 - core index']
  #allocation1 [shape = 'u32[144,128]{1,0:T(1,128)}', space=vmem, size = 0x12000, scoped, tag = 'internal scratch']
  %s0 = inlined_call_operand.vmem [shape: f32[72,32], index: 0, kind: input, shape index: {}]
  %s1 = inlined_call_operand.vmem [shape: f32[8,72], index: 1, kind: input, shape index: {}]
  %s2 = inlined_call_operand.vmem [shape: f32[8,1], index: 2, kind: input, shape index: {}]
  %s3 = inlined_call_operand.vmem [shape: f32[8,1], index: 3, kind: input, shape index: {}]
  %s4 = inlined_call_operand.vmem [shape: f32[8,8], index: 4, kind: input, shape index: {}]
  %s5 = inlined_call_operand.vmem [shape: f32[8,1], index: 5, kind: input, shape index: {}]
  %s6 = inlined_call_operand.vmem [shape: f32[8,1], index: 6, kind: input, shape index: {}]
  %s7 = inlined_call_operand.vmem [shape: f32[8,32], index: 7, kind: input, shape index: {}]
  %s8 = inlined_call_operand.vmem [shape: f32[8,32], index: 8, kind: output, shape index: {}]
  %s9 = sld [smem:[#allocation0]]
  $region42: #{encoder_forward_pallas.8} parent=0
    _
  %s11 = ssub.s32 1, %s9
  %s12 = scalar_select 0, %s11, %s9
  // Predicated region
  $region2: #{encoder_forward_pallas.8} parent=0 // pred_check
    _
  $region3: #{encoder_forward_pallas.8} parent=0 // pred_check_branch
    %14 = sbr.rel (0) target = $region5
  $region4: #{encoder_forward_pallas.8} parent=0 // pred_region
    _
  $region5: #{encoder_forward_pallas.8} parent=0 // pred_fallthru
    _
  // Predicated region
  $region6: #{encoder_forward_pallas.8} parent=0 // pred_check
    _
  $region7: #{encoder_forward_pallas.8} parent=0 // pred_check_branch
    %16 = sbr.rel (0) target = $region9
  $region8: #{encoder_forward_pallas.8} parent=0 // pred_region
    _
  $region9: #{encoder_forward_pallas.8} parent=0 // pred_fallthru
    _
  // Predicated region
  $region10: #{encoder_forward_pallas.8} parent=0 // pred_check
    _
  $region11: #{encoder_forward_pallas.8} parent=0 // pred_check_branch
    %18 = sbr.rel (0) target = $region13
  $region12: #{encoder_forward_pallas.8} parent=0 // pred_region
    _
  $region13: #{encoder_forward_pallas.8} parent=0 // pred_fallthru
    _
  // Predicated region
  $region14: #{encoder_forward_pallas.8} parent=0 // pred_check
    _
  $region15: #{encoder_forward_pallas.8} parent=0 // pred_check_branch
    %20 = sbr.rel (0) target = $region17
  $region16: #{encoder_forward_pallas.8} parent=0 // pred_region
    _
  $region17: #{encoder_forward_pallas.8} parent=0 // pred_fallthru
    _
  // Predicated region
  $region18: #{encoder_forward_pallas.8} parent=0 // pred_check
    _
  $region19: #{encoder_forward_pallas.8} parent=0 // pred_check_branch
    %22 = sbr.rel (0) target = $region21
  $region20: #{encoder_forward_pallas.8} parent=0 // pred_region
    _
  $region21: #{encoder_forward_pallas.8} parent=0 // pred_fallthru
    _
  // Predicated region
  $region22: #{encoder_forward_pallas.8} parent=0 // pred_check
    _
  $region23: #{encoder_forward_pallas.8} parent=0 // pred_check_branch
    %24 = sbr.rel (0) target = $region25
  $region24: #{encoder_forward_pallas.8} parent=0 // pred_region
    _
  $region25: #{encoder_forward_pallas.8} parent=0 // pred_fallthru
    _
  // Predicated region
  $region26: #{encoder_forward_pallas.8} parent=0 // pred_check
    _
  $region27: #{encoder_forward_pallas.8} parent=0 // pred_check_branch
    %26 = sbr.rel (0) target = $region29
  $region28: #{encoder_forward_pallas.8} parent=0 // pred_region
    _
  $region29: #{encoder_forward_pallas.8} parent=0 // pred_fallthru
    _
  // Predicated region
  $region30: #{encoder_forward_pallas.8} parent=0 // pred_check
    _
  $region31: #{encoder_forward_pallas.8} parent=0 // pred_check_branch
    %28 = sbr.rel (0) target = $region33
  $region32: #{encoder_forward_pallas.8} parent=0 // pred_region
    _
  $region33: #{encoder_forward_pallas.8} parent=0 // pred_fallthru
    _
  %v30 = vld [vmem:[%s0] sm:$0xff]
  %v31 = vld [vmem:[%s0 + $0x8] sm:$0xff]
  %v32 = vld [vmem:[%s0 + $0x10] sm:$0xff]
  %v33 = vld [vmem:[%s0 + $0x18] sm:$0xff]
  %v34 = vld [vmem:[%s0 + $0x20] sm:$0xff]
  %v35 = vld [vmem:[%s0 + $0x28] sm:$0xff]
  %v36 = vld [vmem:[%s0 + $0x30] sm:$0xff]
  %v37 = vld [vmem:[%s0 + $0x38] sm:$0xff]
  %v38 = vld [vmem:[%s0 + $0x40] sm:$0xff]
  %v39 = vmax.f32 %v30, 0.0
  %v40 = vmax.f32 %v31, 0.0
  %v41 = vmax.f32 %v32, 0.0
  %v42 = vmax.f32 %v33, 0.0
  %v43 = vmax.f32 %v34, 0.0
  %v44 = vmax.f32 %v35, 0.0
  %v45 = vmax.f32 %v36, 0.0
  %v46 = vmax.f32 %v37, 0.0
  %v47 = vmax.f32 %v38, 0.0
  %v48 = vld [vmem:[%s1] sm:$0xff]
  %v49 = vpack.c.bf16 %v48, %v48
  %v50 = vpack.c.bf16 %v40, %v39
  %v51 = vpack.c.bf16 %v42, %v41
  %v52 = vpack.c.bf16 %v44, %v43
  %v53 = vpack.c.bf16 %v46, %v45
  %v54 = vpack.c.bf16 %v47, %v47
  %vm55 = vcmask 588800
  %v57 = vsel %vm55, %v49, 0
  %vm59 = vcmask 1043456
  %v61 = vsel %vm59, %v54, 0
  %63 = vmatprep.subr.bf16.mxu0 0
  %64 = vmatpush1.bf16.msra.mxu0 %v50
  %65 = vmatprep.subr.bf16.mxu0 0
  %66 = vmatpush1.bf16.msra.mxu0 %v51
  %67 = vmatprep.subr.bf16.mxu0 0
  %68 = vmatpush1.bf16.msra.mxu0 %v52
  %69 = vmatprep.subr.bf16.mxu0 0
  %70 = vmatpush1.bf16.msra.mxu0 %v53
  %71 = vmatprep.subr.bf16.mxu0 0
  %72 = vmatpush1.bf16.msra.mxu0 %v61
  %73 = vmatprep.subr.bf16.mxu0 0
  %74 = vmatpush1.bf16.msra.mxu0 0
  %75 = vmatprep.subr.bf16.mxu0 0
  %76 = vmatpush1.bf16.msra.mxu0 0
  %77 = vmatprep.subr.bf16.mxu0 0
  %78 = vmatpush1.bf16.msra.mxu0 0
  %79 = vmatprep.subr.bf16.mxu0 0
  %80 = vmatpush1.bf16.msra.mxu0 0
  %81 = vmatprep.subr.bf16.mxu0 0
  %82 = vmatpush1.bf16.msra.mxu0 0
  %83 = vmatprep.subr.bf16.mxu0 0
  %84 = vmatpush1.bf16.msra.mxu0 0
  %85 = vmatprep.subr.bf16.mxu0 0
  %86 = vmatpush1.bf16.msra.mxu0 0
  %87 = vmatprep.subr.bf16.mxu0 0
  %88 = vmatpush1.bf16.msra.mxu0 0
  %89 = vmatprep.subr.bf16.mxu0 0
  %90 = vmatpush1.bf16.msra.mxu0 0
  %91 = vmatprep.subr.bf16.mxu0 0
  %92 = vmatpush1.bf16.msra.mxu0 0
  %93 = vmatprep.subr.bf16.mxu0 0
  %94 = vmatpush1.bf16.msra.mxu0 0
  %95 = vmatprep.mubr.bf16.mxu0 0
  %96 = vmatmul.mubr.bf16.gmra.mrb[0].mxu0 %v57
  %v97 = vpop.f32.mrb[0].mxu0
  %v98 = vadd.f32 0.0, %v97
  %v99 = vpop.f32.mrb[0].mxu0
  %v100 = vpop.f32.mrb[0].mxu0
  %v101 = vpop.f32.mrb[0].mxu0
  %102 = vdwg.mxu0
  %v103 = vld [vmem:[%s2] sm:$0xff]
  %v104 = vld [vmem:[%s3] sm:$0xff]
  %vm105 = vcmask 261120
  %v106 = vsel %vm105, %v98, 0.0
  %107 = vadd.xlane.f32.xlu0 %v106
  %v108 = vpop.xlane.xlu0 %107
  %v109 = vmul.f32 %v108, 0.03125
  %v110 = vsub.f32 %v98, %v109
  %v111 = vmul.f32 %v110, %v110
  %v112 = vsel %vm105, %v111, 0.0
  %113 = vadd.xlane.f32.xlu0 %v112
  %v114 = vpop.xlane.xlu0 %113
  %v115 = vmul.f32 %v114, 0.03125
  %v116 = vadd.f32 %v115, 1e-05
  %v117 = vrsqrt.pop %v116
  %v118 = vmul.f32 %v110, %v117
  %120 = vset.pattern.permute.xlu0 0
  %121 = vperm.xlu0 %120, %v103
  %v122 = vpop.permute.xlu0 %121
  %v124 = vmul.f32 %v118, %v122
  %126 = vset.pattern.permute.xlu0 0
  %127 = vperm.xlu0 %126, %v104
  %v128 = vpop.permute.xlu0 %127
  %v130 = vadd.f32 %v124, %v128
  %v131 = vmax.f32 %v130, 0.0
  %v132 = vld [vmem:[%s4] sm:$0xff]
  %v133 = vpack.c.bf16 %v132, %v132
  %v134 = vpack.c.bf16 %v131, %v131
  %vm135 = vcmask 64512
  %v137 = vsel %vm135, %v133, 0
  %v140 = vsel %vm59, %v134, 0
  %142 = vmatprep.subr.bf16.mxu0 0
  %143 = vmatpush1.bf16.msra.mxu0 %v140
  %144 = vmatprep.subr.bf16.mxu0 0
  %145 = vmatpush1.bf16.msra.mxu0 0
  %146 = vmatprep.subr.bf16.mxu0 0
  %147 = vmatpush1.bf16.msra.mxu0 0
  %148 = vmatprep.subr.bf16.mxu0 0
  %149 = vmatpush1.bf16.msra.mxu0 0
  %150 = vmatprep.subr.bf16.mxu0 0
  %151 = vmatpush1.bf16.msra.mxu0 0
  %152 = vmatprep.subr.bf16.mxu0 0
  %153 = vmatpush1.bf16.msra.mxu0 0
  %154 = vmatprep.subr.bf16.mxu0 0
  %155 = vmatpush1.bf16.msra.mxu0 0
  %156 = vmatprep.subr.bf16.mxu0 0
  %157 = vmatpush1.bf16.msra.mxu0 0
  %158 = vmatprep.subr.bf16.mxu0 0
  %159 = vmatpush1.bf16.msra.mxu0 0
  %160 = vmatprep.subr.bf16.mxu0 0
  %161 = vmatpush1.bf16.msra.mxu0 0
  %162 = vmatprep.subr.bf16.mxu0 0
  %163 = vmatpush1.bf16.msra.mxu0 0
  %164 = vmatprep.subr.bf16.mxu0 0
  %165 = vmatpush1.bf16.msra.mxu0 0
  %166 = vmatprep.subr.bf16.mxu0 0
  %167 = vmatpush1.bf16.msra.mxu0 0
  %168 = vmatprep.subr.bf16.mxu0 0
  %169 = vmatpush1.bf16.msra.mxu0 0
  %170 = vmatprep.subr.bf16.mxu0 0
  %171 = vmatpush1.bf16.msra.mxu0 0
  %172 = vmatprep.subr.bf16.mxu0 0
  %173 = vmatpush1.bf16.msra.mxu0 0
  %174 = vmatprep.mubr.bf16.mxu0 0
  %175 = vmatmul.mubr.bf16.gmra.mrb[0].mxu0 %v137
  %v176 = vpop.f32.mrb[0].mxu0
  %v177 = vadd.f32 0.0, %v176
  %v178 = vpop.f32.mrb[0].mxu0
  %v179 = vpop.f32.mrb[0].mxu0
  %v180 = vpop.f32.mrb[0].mxu0
  %181 = vdwg.mxu0
  %v182 = vld [vmem:[%s5] sm:$0xff]
  %v183 = vld [vmem:[%s6] sm:$0xff]
  %v184 = vsel %vm105, %v177, 0.0
  %185 = vadd.xlane.f32.xlu0 %v184
  %v186 = vpop.xlane.xlu0 %185
  %v187 = vmul.f32 %v186, 0.03125
  %v188 = vsub.f32 %v177, %v187
  %v189 = vmul.f32 %v188, %v188
  %v190 = vsel %vm105, %v189, 0.0
  %191 = vadd.xlane.f32.xlu0 %v190
  %v192 = vpop.xlane.xlu0 %191
  %v193 = vmul.f32 %v192, 0.03125
  %v194 = vadd.f32 %v193, 1e-05
  %v195 = vrsqrt.pop %v194
  %v196 = vmul.f32 %v188, %v195
  %198 = vset.pattern.permute.xlu0 0
  %199 = vperm.xlu0 %198, %v182
  %v200 = vpop.permute.xlu0 %199
  %v202 = vmul.f32 %v196, %v200
  %204 = vset.pattern.permute.xlu0 0
  %205 = vperm.xlu0 %204, %v183
  %v206 = vpop.permute.xlu0 %205
  %v208 = vadd.f32 %v202, %v206
  %v209 = vld [vmem:[%s7] sm:$0xff]
  %v210 = vadd.f32 %v209, %v208
  %211 = vst.msk [vmem:[%s8] sm:$0xff] %vm105, %v210
  // Predicated region
  $region34: #{encoder_forward_pallas.8} parent=0 // pred_check
    _
  $region35: #{encoder_forward_pallas.8} parent=0 // pred_check_branch
    %213 = sbr.rel (0) target = $region37
  $region36: #{encoder_forward_pallas.8} parent=0 // pred_region
    _
  $region37: #{encoder_forward_pallas.8} parent=0 // pred_fallthru
    _
  // Predicated region
  $region38: #{encoder_forward_pallas.8} parent=0 // pred_check
    _
  $region39: #{encoder_forward_pallas.8} parent=0 // pred_check_branch
    %215 = sbr.rel (0) target = $region41
  $region40: #{encoder_forward_pallas.8} parent=0 // pred_region
    _
  $region41: #{encoder_forward_pallas.8} parent=0 // pred_fallthru
    _

// kernel: encoder_forward_pallas.9
$region0: #{encoder_forward_pallas.9}
  #allocation0 [shape = 'u32[]', space=smem, size = 0x4, offset = 0x4, fixed_abs, tag = 'smem constant byte address 0x4 - core index']
  #allocation1 [shape = 'u32[144,128]{1,0:T(1,128)}', space=vmem, size = 0x12000, scoped, tag = 'internal scratch']
  %s0 = inlined_call_operand.vmem [shape: f32[72,32], index: 0, kind: input, shape index: {}]
  %s1 = inlined_call_operand.vmem [shape: f32[8,72], index: 1, kind: input, shape index: {}]
  %s2 = inlined_call_operand.vmem [shape: f32[8,1], index: 2, kind: input, shape index: {}]
  %s3 = inlined_call_operand.vmem [shape: f32[8,1], index: 3, kind: input, shape index: {}]
  %s4 = inlined_call_operand.vmem [shape: f32[8,8], index: 4, kind: input, shape index: {}]
  %s5 = inlined_call_operand.vmem [shape: f32[8,1], index: 5, kind: input, shape index: {}]
  %s6 = inlined_call_operand.vmem [shape: f32[8,1], index: 6, kind: input, shape index: {}]
  %s7 = inlined_call_operand.vmem [shape: f32[8,32], index: 7, kind: input, shape index: {}]
  %s8 = inlined_call_operand.vmem [shape: f32[32,8], index: 8, kind: input, shape index: {}]
  %s9 = inlined_call_operand.vmem [shape: f32[32,1], index: 9, kind: input, shape index: {}]
  %s10 = inlined_call_operand.vmem [shape: f32[32,32], index: 10, kind: output, shape index: {}]
  %s11 = sld [smem:[#allocation0]]
  $region50: #{encoder_forward_pallas.9} parent=0
    _
  %s13 = ssub.s32 1, %s11
  %s14 = scalar_select 0, %s13, %s11
  // Predicated region
  $region2: #{encoder_forward_pallas.9} parent=0 // pred_check
    _
  $region3: #{encoder_forward_pallas.9} parent=0 // pred_check_branch
    %16 = sbr.rel (0) target = $region5
  $region4: #{encoder_forward_pallas.9} parent=0 // pred_region
    _
  $region5: #{encoder_forward_pallas.9} parent=0 // pred_fallthru
    _
  // Predicated region
  $region6: #{encoder_forward_pallas.9} parent=0 // pred_check
    _
  $region7: #{encoder_forward_pallas.9} parent=0 // pred_check_branch
    %18 = sbr.rel (0) target = $region9
  $region8: #{encoder_forward_pallas.9} parent=0 // pred_region
    _
  $region9: #{encoder_forward_pallas.9} parent=0 // pred_fallthru
    _
  // Predicated region
  $region10: #{encoder_forward_pallas.9} parent=0 // pred_check
    _
  $region11: #{encoder_forward_pallas.9} parent=0 // pred_check_branch
    %20 = sbr.rel (0) target = $region13
  $region12: #{encoder_forward_pallas.9} parent=0 // pred_region
    _
  $region13: #{encoder_forward_pallas.9} parent=0 // pred_fallthru
    _
  // Predicated region
  $region14: #{encoder_forward_pallas.9} parent=0 // pred_check
    _
  $region15: #{encoder_forward_pallas.9} parent=0 // pred_check_branch
    %22 = sbr.rel (0) target = $region17
  $region16: #{encoder_forward_pallas.9} parent=0 // pred_region
    _
  $region17: #{encoder_forward_pallas.9} parent=0 // pred_fallthru
    _
  // Predicated region
  $region18: #{encoder_forward_pallas.9} parent=0 // pred_check
    _
  $region19: #{encoder_forward_pallas.9} parent=0 // pred_check_branch
    %24 = sbr.rel (0) target = $region21
  $region20: #{encoder_forward_pallas.9} parent=0 // pred_region
    _
  $region21: #{encoder_forward_pallas.9} parent=0 // pred_fallthru
    _
  // Predicated region
  $region22: #{encoder_forward_pallas.9} parent=0 // pred_check
    _
  $region23: #{encoder_forward_pallas.9} parent=0 // pred_check_branch
    %26 = sbr.rel (0) target = $region25
  $region24: #{encoder_forward_pallas.9} parent=0 // pred_region
    _
  $region25: #{encoder_forward_pallas.9} parent=0 // pred_fallthru
    _
  // Predicated region
  $region26: #{encoder_forward_pallas.9} parent=0 // pred_check
    _
  $region27: #{encoder_forward_pallas.9} parent=0 // pred_check_branch
    %28 = sbr.rel (0) target = $region29
  $region28: #{encoder_forward_pallas.9} parent=0 // pred_region
    _
  $region29: #{encoder_forward_pallas.9} parent=0 // pred_fallthru
    _
  // Predicated region
  $region30: #{encoder_forward_pallas.9} parent=0 // pred_check
    _
  $region31: #{encoder_forward_pallas.9} parent=0 // pred_check_branch
    %30 = sbr.rel (0) target = $region33
  $region32: #{encoder_forward_pallas.9} parent=0 // pred_region
    _
  $region33: #{encoder_forward_pallas.9} parent=0 // pred_fallthru
    _
  // Predicated region
  $region34: #{encoder_forward_pallas.9} parent=0 // pred_check
    _
  $region35: #{encoder_forward_pallas.9} parent=0 // pred_check_branch
    %32 = sbr.rel (0) target = $region37
  $region36: #{encoder_forward_pallas.9} parent=0 // pred_region
    _
  $region37: #{encoder_forward_pallas.9} parent=0 // pred_fallthru
    _
  // Predicated region
  $region38: #{encoder_forward_pallas.9} parent=0 // pred_check
    _
  $region39: #{encoder_forward_pallas.9} parent=0 // pred_check_branch
    %34 = sbr.rel (0) target = $region41
  $region40: #{encoder_forward_pallas.9} parent=0 // pred_region
    _
  $region41: #{encoder_forward_pallas.9} parent=0 // pred_fallthru
    _
  %v36 = vld [vmem:[%s0] sm:$0xff]
  %v37 = vld [vmem:[%s0 + $0x8] sm:$0xff]
  %v38 = vld [vmem:[%s0 + $0x10] sm:$0xff]
  %v39 = vld [vmem:[%s0 + $0x18] sm:$0xff]
  %v40 = vld [vmem:[%s0 + $0x20] sm:$0xff]
  %v41 = vld [vmem:[%s0 + $0x28] sm:$0xff]
  %v42 = vld [vmem:[%s0 + $0x30] sm:$0xff]
  %v43 = vld [vmem:[%s0 + $0x38] sm:$0xff]
  %v44 = vld [vmem:[%s0 + $0x40] sm:$0xff]
  %v45 = vmax.f32 %v36, 0.0
  %v46 = vmax.f32 %v37, 0.0
  %v47 = vmax.f32 %v38, 0.0
  %v48 = vmax.f32 %v39, 0.0
  %v49 = vmax.f32 %v40, 0.0
  %v50 = vmax.f32 %v41, 0.0
  %v51 = vmax.f32 %v42, 0.0
  %v52 = vmax.f32 %v43, 0.0
  %v53 = vmax.f32 %v44, 0.0
  %v54 = vld [vmem:[%s1] sm:$0xff]
  %v55 = vpack.c.bf16 %v54, %v54
  %v56 = vpack.c.bf16 %v46, %v45
  %v57 = vpack.c.bf16 %v48, %v47
  %v58 = vpack.c.bf16 %v50, %v49
  %v59 = vpack.c.bf16 %v52, %v51
  %v60 = vpack.c.bf16 %v53, %v53
  %vm61 = vcmask 588800
  %v63 = vsel %vm61, %v55, 0
  %vm65 = vcmask 1043456
  %v67 = vsel %vm65, %v60, 0
  %69 = vmatprep.subr.bf16.mxu0 0
  %70 = vmatpush1.bf16.msra.mxu0 %v56
  %71 = vmatprep.subr.bf16.mxu0 0
  %72 = vmatpush1.bf16.msra.mxu0 %v57
  %73 = vmatprep.subr.bf16.mxu0 0
  %74 = vmatpush1.bf16.msra.mxu0 %v58
  %75 = vmatprep.subr.bf16.mxu0 0
  %76 = vmatpush1.bf16.msra.mxu0 %v59
  %77 = vmatprep.subr.bf16.mxu0 0
  %78 = vmatpush1.bf16.msra.mxu0 %v67
  %79 = vmatprep.subr.bf16.mxu0 0
  %80 = vmatpush1.bf16.msra.mxu0 0
  %81 = vmatprep.subr.bf16.mxu0 0
  %82 = vmatpush1.bf16.msra.mxu0 0
  %83 = vmatprep.subr.bf16.mxu0 0
  %84 = vmatpush1.bf16.msra.mxu0 0
  %85 = vmatprep.subr.bf16.mxu0 0
  %86 = vmatpush1.bf16.msra.mxu0 0
  %87 = vmatprep.subr.bf16.mxu0 0
  %88 = vmatpush1.bf16.msra.mxu0 0
  %89 = vmatprep.subr.bf16.mxu0 0
  %90 = vmatpush1.bf16.msra.mxu0 0
  %91 = vmatprep.subr.bf16.mxu0 0
  %92 = vmatpush1.bf16.msra.mxu0 0
  %93 = vmatprep.subr.bf16.mxu0 0
  %94 = vmatpush1.bf16.msra.mxu0 0
  %95 = vmatprep.subr.bf16.mxu0 0
  %96 = vmatpush1.bf16.msra.mxu0 0
  %97 = vmatprep.subr.bf16.mxu0 0
  %98 = vmatpush1.bf16.msra.mxu0 0
  %99 = vmatprep.subr.bf16.mxu0 0
  %100 = vmatpush1.bf16.msra.mxu0 0
  %101 = vmatprep.mubr.bf16.mxu0 0
  %102 = vmatmul.mubr.bf16.gmra.mrb[0].mxu0 %v63
  %v103 = vpop.f32.mrb[0].mxu0
  %v104 = vadd.f32 0.0, %v103
  %v105 = vpop.f32.mrb[0].mxu0
  %v106 = vpop.f32.mrb[0].mxu0
  %v107 = vpop.f32.mrb[0].mxu0
  %108 = vdwg.mxu0
  %v109 = vld [vmem:[%s2] sm:$0xff]
  %v110 = vld [vmem:[%s3] sm:$0xff]
  %vm111 = vcmask 261120
  %v112 = vsel %vm111, %v104, 0.0
  %113 = vadd.xlane.f32.xlu0 %v112
  %v114 = vpop.xlane.xlu0 %113
  %v115 = vmul.f32 %v114, 0.03125
  %v116 = vsub.f32 %v104, %v115
  %v117 = vmul.f32 %v116, %v116
  %v118 = vsel %vm111, %v117, 0.0
  %119 = vadd.xlane.f32.xlu0 %v118
  %v120 = vpop.xlane.xlu0 %119
  %v121 = vmul.f32 %v120, 0.03125
  %v122 = vadd.f32 %v121, 1e-05
  %v123 = vrsqrt.pop %v122
  %v124 = vmul.f32 %v116, %v123
  %126 = vset.pattern.permute.xlu0 0
  %127 = vperm.xlu0 %126, %v109
  %v128 = vpop.permute.xlu0 %127
  %v130 = vmul.f32 %v124, %v128
  %132 = vset.pattern.permute.xlu0 0
  %133 = vperm.xlu0 %132, %v110
  %v134 = vpop.permute.xlu0 %133
  %v136 = vadd.f32 %v130, %v134
  %v137 = vmax.f32 %v136, 0.0
  %v138 = vld [vmem:[%s4] sm:$0xff]
  %v139 = vpack.c.bf16 %v138, %v138
  %v140 = vpack.c.bf16 %v137, %v137
  %vm141 = vcmask 64512
  %v143 = vsel %vm141, %v139, 0
  %v146 = vsel %vm65, %v140, 0
  %148 = vmatprep.subr.bf16.mxu0 0
  %149 = vmatpush1.bf16.msra.mxu0 %v146
  %150 = vmatprep.subr.bf16.mxu0 0
  %151 = vmatpush1.bf16.msra.mxu0 0
  %152 = vmatprep.subr.bf16.mxu0 0
  %153 = vmatpush1.bf16.msra.mxu0 0
  %154 = vmatprep.subr.bf16.mxu0 0
  %155 = vmatpush1.bf16.msra.mxu0 0
  %156 = vmatprep.subr.bf16.mxu0 0
  %157 = vmatpush1.bf16.msra.mxu0 0
  %158 = vmatprep.subr.bf16.mxu0 0
  %159 = vmatpush1.bf16.msra.mxu0 0
  %160 = vmatprep.subr.bf16.mxu0 0
  %161 = vmatpush1.bf16.msra.mxu0 0
  %162 = vmatprep.subr.bf16.mxu0 0
  %163 = vmatpush1.bf16.msra.mxu0 0
  %164 = vmatprep.subr.bf16.mxu0 0
  %165 = vmatpush1.bf16.msra.mxu0 0
  %166 = vmatprep.subr.bf16.mxu0 0
  %167 = vmatpush1.bf16.msra.mxu0 0
  %168 = vmatprep.subr.bf16.mxu0 0
  %169 = vmatpush1.bf16.msra.mxu0 0
  %170 = vmatprep.subr.bf16.mxu0 0
  %171 = vmatpush1.bf16.msra.mxu0 0
  %172 = vmatprep.subr.bf16.mxu0 0
  %173 = vmatpush1.bf16.msra.mxu0 0
  %174 = vmatprep.subr.bf16.mxu0 0
  %175 = vmatpush1.bf16.msra.mxu0 0
  %176 = vmatprep.subr.bf16.mxu0 0
  %177 = vmatpush1.bf16.msra.mxu0 0
  %178 = vmatprep.subr.bf16.mxu0 0
  %179 = vmatpush1.bf16.msra.mxu0 0
  %180 = vmatprep.mubr.bf16.mxu0 0
  %181 = vmatmul.mubr.bf16.gmra.mrb[0].mxu0 %v143
  %v182 = vpop.f32.mrb[0].mxu0
  %v183 = vadd.f32 0.0, %v182
  %v184 = vpop.f32.mrb[0].mxu0
  %v185 = vpop.f32.mrb[0].mxu0
  %v186 = vpop.f32.mrb[0].mxu0
  %187 = vdwg.mxu0
  %v188 = vld [vmem:[%s5] sm:$0xff]
  %v189 = vld [vmem:[%s6] sm:$0xff]
  %v190 = vsel %vm111, %v183, 0.0
  %191 = vadd.xlane.f32.xlu0 %v190
  %v192 = vpop.xlane.xlu0 %191
  %v193 = vmul.f32 %v192, 0.03125
  %v194 = vsub.f32 %v183, %v193
  %v195 = vmul.f32 %v194, %v194
  %v196 = vsel %vm111, %v195, 0.0
  %197 = vadd.xlane.f32.xlu0 %v196
  %v198 = vpop.xlane.xlu0 %197
  %v199 = vmul.f32 %v198, 0.03125
  %v200 = vadd.f32 %v199, 1e-05
  %v201 = vrsqrt.pop %v200
  %v202 = vmul.f32 %v194, %v201
  %204 = vset.pattern.permute.xlu0 0
  %205 = vperm.xlu0 %204, %v188
  %v206 = vpop.permute.xlu0 %205
  %v208 = vmul.f32 %v202, %v206
  %210 = vset.pattern.permute.xlu0 0
  %211 = vperm.xlu0 %210, %v189
  %v212 = vpop.permute.xlu0 %211
  %v214 = vadd.f32 %v208, %v212
  %v215 = vld [vmem:[%s7] sm:$0xff]
  %v216 = vadd.f32 %v215, %v214
  %v217 = vld [vmem:[%s8] sm:$0xff]
  %v218 = vld [vmem:[%s8 + $0x8] sm:$0xff]
  %v219 = vld [vmem:[%s8 + $0x10] sm:$0xff]
  %v220 = vld [vmem:[%s8 + $0x18] sm:$0xff]
  %v221 = vpack.c.bf16 %v218, %v217
  %v222 = vpack.c.bf16 %v220, %v219
  %v223 = vpack.c.bf16 %v216, %v216
  %v224 = vld [vmem:[%s9] sm:$0xff]
  %v225 = vld [vmem:[%s9 + $0x8] sm:$0xff]
  %v226 = vld [vmem:[%s9 + $0x10] sm:$0xff]
  %v227 = vld [vmem:[%s9 + $0x18] sm:$0xff]
  %229 = vset.pattern.permute.xlu0 0
  %230 = vperm.xlu0 %229, %v224
  %v231 = vpop.permute.xlu0 %230
  %234 = vset.pattern.permute.xlu0 0
  %235 = vperm.xlu0 %234, %v225
  %v236 = vpop.permute.xlu0 %235
  %239 = vset.pattern.permute.xlu0 0
  %240 = vperm.xlu0 %239, %v226
  %v241 = vpop.permute.xlu0 %240
  %244 = vset.pattern.permute.xlu0 0
  %245 = vperm.xlu0 %244, %v227
  %v246 = vpop.permute.xlu0 %245
  %v249 = vsel %vm141, %v221, 0
  %v252 = vsel %vm141, %v222, 0
  %v255 = vsel %vm65, %v223, 0
  %257 = vmatprep.subr.bf16.mxu0 0
  %258 = vmatpush1.bf16.msra.mxu0 %v255
  %259 = vmatprep.subr.bf16.mxu0 0
  %260 = vmatpush1.bf16.msra.mxu0 0
  %261 = vmatprep.subr.bf16.mxu0 0
  %262 = vmatpush1.bf16.msra.mxu0 0
  %263 = vmatprep.subr.bf16.mxu0 0
  %264 = vmatpush1.bf16.msra.mxu0 0
  %265 = vmatprep.subr.bf16.mxu0 0
  %266 = vmatpush1.bf16.msra.mxu0 0
  %267 = vmatprep.subr.bf16.mxu0 0
  %268 = vmatpush1.bf16.msra.mxu0 0
  %269 = vmatprep.subr.bf16.mxu0 0
  %270 = vmatpush1.bf16.msra.mxu0 0
  %271 = vmatprep.subr.bf16.mxu0 0
  %272 = vmatpush1.bf16.msra.mxu0 0
  %273 = vmatprep.subr.bf16.mxu0 0
  %274 = vmatpush1.bf16.msra.mxu0 0
  %275 = vmatprep.subr.bf16.mxu0 0
  %276 = vmatpush1.bf16.msra.mxu0 0
  %277 = vmatprep.subr.bf16.mxu0 0
  %278 = vmatpush1.bf16.msra.mxu0 0
  %279 = vmatprep.subr.bf16.mxu0 0
  %280 = vmatpush1.bf16.msra.mxu0 0
  %281 = vmatprep.subr.bf16.mxu0 0
  %282 = vmatpush1.bf16.msra.mxu0 0
  %283 = vmatprep.subr.bf16.mxu0 0
  %284 = vmatpush1.bf16.msra.mxu0 0
  %285 = vmatprep.subr.bf16.mxu0 0
  %286 = vmatpush1.bf16.msra.mxu0 0
  %287 = vmatprep.subr.bf16.mxu0 0
  %288 = vmatpush1.bf16.msra.mxu0 0
  %289 = vmatprep.mubr.bf16.mxu0 0
  %290 = vmatmul.mubr.bf16.gmra.mrb[0].mxu0 %v249
  %v291 = vpop.f32.mrb[0].mxu0
  %v292 = vadd.f32 %v231, %v291
  %v293 = vpop.f32.mrb[0].mxu0
  %v294 = vpop.f32.mrb[0].mxu0
  %v295 = vadd.f32 %v236, %v294
  %v296 = vpop.f32.mrb[0].mxu0
  %297 = vmatprep.mubr.bf16.mxu0 0
  %298 = vmatmul.mubr.bf16.gmra.mrb[0].mxu0 %v252
  %v299 = vpop.f32.mrb[0].mxu0
  %v300 = vadd.f32 %v241, %v299
  %v301 = vpop.f32.mrb[0].mxu0
  %v302 = vpop.f32.mrb[0].mxu0
  %v303 = vadd.f32 %v246, %v302
  %v304 = vpop.f32.mrb[0].mxu0
  %305 = vdwg.mxu0
  %306 = vst.msk [vmem:[%s10] sm:$0xff] %vm111, %v292
  %307 = vst.msk [vmem:[%s10 + $0x8] sm:$0xff] %vm111, %v295
  %308 = vst.msk [vmem:[%s10 + $0x10] sm:$0xff] %vm111, %v300
  %309 = vst.msk [vmem:[%s10 + $0x18] sm:$0xff] %vm111, %v303
  // Predicated region
  $region42: #{encoder_forward_pallas.9} parent=0 // pred_check
    _
  $region43: #{encoder_forward_pallas.9} parent=0 // pred_check_branch
    %311 = sbr.rel (0) target = $region45
  $region44: #{encoder_forward_pallas.9} parent=0 // pred_region
    _
  $region45: #{encoder_forward_pallas.9} parent=0 // pred_fallthru
    _
  // Predicated region
  $region46: #{encoder_forward_pallas.9} parent=0 // pred_check
    _
  $region47: #{encoder_forward_pallas.9} parent=0 // pred_check_branch
    %313 = sbr.rel (0) target = $region49
  $region48: #{encoder_forward_pallas.9} parent=0 // pred_region
    _
  $region49: #{encoder_forward_pallas.9} parent=0 // pred_fallthru
    _

</llo_original>
